<compile_context>
chip_gen: v6e
topology: v6e:2x2x1
jax: 0.10.0
libtpu: 0.0.40
codegen_flags: <defaults>
</compile_context>

<pallas_src>
import functools

import jax
import jax.numpy as jnp
from jax import lax
from jax.experimental import pallas as pl
from jax.experimental.pallas import tpu as pltpu

# The pure-JAX reference check below needs full-f32 matmuls (not bf16 passes).
jax.config.update("jax_default_matmul_precision", "highest")


def _graph_constructor_kernel(nv1_in_ref, nv2_in_ref, w1_ref, b1_ref,
                              w2_ref, b2_ref, adj_ref, nv1_s, nv2_s,
                              *, alpha, k):
    layer = pl.program_id(0)

    # Load the initial node vectors into the layer-resident VMEM scratch once.
    @pl.when(layer == 0)
    def _():
        nv1_s[...] = nv1_in_ref[...]
        nv2_s[...] = nv2_in_ref[...]

    # nodevec_i = tanh(alpha * ((nodevec_i * scale) @ W_i + b_i))
    # (scale already folded into W_i by the wrapper).
    nv1 = jnp.tanh(alpha * (jnp.dot(nv1_s[...], w1_ref[0],
                                    preferred_element_type=jnp.float32)
                            + b1_ref[0]))
    nv2 = jnp.tanh(alpha * (jnp.dot(nv2_s[...], w2_ref[0],
                                    preferred_element_type=jnp.float32)
                            + b2_ref[0]))
    nv1_s[...] = nv1
    nv2_s[...] = nv2

    # a = nv1 @ nv2.T - nv2 @ nv1.T is antisymmetric: one MXU matmul plus an
    # XLU transpose instead of two MXU passes.
    m = lax.dot_general(nv1, nv2, (((1,), (1,)), ((), ())),
                        preferred_element_type=jnp.float32)
    a = m - m.T
    adj0 = jnp.maximum(jnp.tanh(alpha * a), 0.0)

    # Exact row-wise top-k mask: k argmax passes, ties broken toward the
    # lowest column index (same convention as lax.top_k). Exactly k entries
    # are kept per row, matching torch's topk+scatter masking.
    n = adj0.shape[1]
    col = lax.broadcasted_iota(jnp.int32, adj0.shape, 1).astype(jnp.float32)
    work = adj0
    mask = jnp.zeros_like(adj0)
    for _ in range(k):                      # k is a small static int -> unrolled
        row_max = jnp.max(work, axis=1, keepdims=True)
        cand = jnp.where(work == row_max, col, float(n))
        pick = jnp.min(cand, axis=1, keepdims=True)
        sel = col == pick
        mask = jnp.where(sel, 1.0, mask)
        work = jnp.where(sel, -jnp.inf, work)

    adj_ref[0] = adj0 * mask


@functools.partial(jax.jit, static_argnames=("alpha", "k"))
def graph_constructor_forward(nv1, nv2, w1, b1, w2, b2, scale_set, *, alpha, k):
    """All layers of graph_constructor.forward in one fused pallas_call."""
    n, d = nv1.shape
    num_layers = w1.shape[0]

    # Fold the per-layer scale into the pre-transposed weights:
    # (x * s) @ W == x @ (s * W).
    s = jnp.reshape(scale_set.astype(jnp.float32), (num_layers, 1, 1))
    w1s = w1 * s
    w2s = w2 * s

    kernel = functools.partial(_graph_constructor_kernel,
                               alpha=float(alpha), k=int(k))

    grid_spec = pltpu.PrefetchScalarGridSpec(
        num_scalar_prefetch=0,
        grid=(num_layers,),
        in_specs=[
            pl.BlockSpec((n, d), lambda l: (0, 0)),        # nodevec1 (layer 0)
            pl.BlockSpec((n, d), lambda l: (0, 0)),        # nodevec2 (layer 0)
            pl.BlockSpec((1, d, d), lambda l: (l, 0, 0)),  # scaled W1[l]
            pl.BlockSpec((1, 1, d), lambda l: (l, 0, 0)),  # b1[l]
            pl.BlockSpec((1, d, d), lambda l: (l, 0, 0)),  # scaled W2[l]
            pl.BlockSpec((1, 1, d), lambda l: (l, 0, 0)),  # b2[l]
        ],
        out_specs=pl.BlockSpec((1, n, n), lambda l: (l, 0, 0)),
        scratch_shapes=[pltpu.VMEM((n, d), jnp.float32),   # resident nodevec1
                        pltpu.VMEM((n, d), jnp.float32)],  # resident nodevec2
    )

    # Rough VMEM footprint; raise the scoped limit only if the 32 MiB default
    # would not fit, capped at 64 MiB so the same config is v7x-safe.
    est_bytes = 4 * (8 * n * n + 8 * n * d + 4 * d * d + 4 * d) + (1 << 20)
    compiler_kwargs = dict(dimension_semantics=("arbitrary",))
    if est_bytes > (32 << 20):
        compiler_kwargs["vmem_limit_bytes"] = min(est_bytes, 64 << 20)

    # TODO(synk): for large N, tile the adjacency over row blocks with a second
    # "parallel" grid axis (megacore on v7x) and keep N a multiple of 128 for
    # lane-dense stores; that tiling replaces the M - M.T transpose trick with
    # two (TM, D) x (D, N) matmuls per row tile.
    return pl.pallas_call(
        kernel,
        grid_spec=grid_spec,
        out_shape=jax.ShapeDtypeStruct((num_layers, n, n), jnp.float32),
        compiler_params=pltpu.CompilerParams(**compiler_kwargs),
    )(nv1, nv2, w1s, b1, w2s, b2)


class GraphConstructorPallas:
    """JAX/Pallas port of the torch graph_constructor module."""

    def __init__(self, nnodes, k, dim, layer_num, alpha=3.0, key=None):
        self.nnodes = nnodes
        self.k = k
        self.dim = dim
        self.layers = layer_num
        self.alpha = float(alpha)

        key = jax.random.PRNGKey(0) if key is None else key
        keys = jax.random.split(key, 2 + 4 * layer_num)
        # nn.Embedding default init: N(0, 1)
        self.emb1 = jax.random.normal(keys[0], (nnodes, dim), jnp.float32)
        self.emb2 = jax.random.normal(keys[1], (nnodes, dim), jnp.float32)
        # nn.Linear-style init: U(-1/sqrt(fan_in), 1/sqrt(fan_in)); weights are
        # stored pre-transposed to (in, out) and stacked over layers.
        bound = 1.0 / (dim ** 0.5)
        w1, b1, w2, b2 = [], [], [], []
        for i in range(layer_num):
            k0, k1, k2, k3 = keys[2 + 4 * i: 6 + 4 * i]
            w1.append(jax.random.uniform(k0, (dim, dim), jnp.float32, -bound, bound))
            b1.append(jax.random.uniform(k1, (1, dim), jnp.float32, -bound, bound))
            w2.append(jax.random.uniform(k2, (dim, dim), jnp.float32, -bound, bound))
            b2.append(jax.random.uniform(k3, (1, dim), jnp.float32, -bound, bound))
        self.w1 = jnp.stack(w1)   # (L, dim, dim)
        self.b1 = jnp.stack(b1)   # (L, 1, dim)
        self.w2 = jnp.stack(w2)
        self.b2 = jnp.stack(b2)

    def __call__(self, idx, scale_set):
        # Embedding lookup is glue (plain JAX gather).
        nv1 = self.emb1[idx]
        nv2 = self.emb2[idx]
        adj = graph_constructor_forward(nv1, nv2, self.w1, self.b1,
                                        self.w2, self.b2,
                                        jnp.asarray(scale_set, jnp.float32),
                                        alpha=self.alpha, k=self.k)
        return [adj[i] for i in range(self.layers)]


def _reference_adj0(nv1, nv2, w1, b1, w2, b2, scale_set, *, alpha):
    """Plain-JAX mirror of the torch forward (pre-top-k adjacencies)."""
    adj0_list = []
    for i in range(w1.shape[0]):
        s = scale_set[i]
        nv1 = jnp.tanh(alpha * ((nv1 * s) @ w1[i] + b1[i]))
        nv2 = jnp.tanh(alpha * ((nv2 * s) @ w2[i] + b2[i]))
        a = nv1 @ nv2.T - nv2 @ nv1.T
        adj0_list.append(jnp.maximum(jnp.tanh(alpha * a), 0.0))
    return adj0_list


if __name__ == "__main__":
    nnodes, topk, dim, layer_num = 16, 4, 32, 2

    gc = GraphConstructorPallas(nnodes, topk, dim, layer_num, alpha=3.0,
                                key=jax.random.PRNGKey(0))
    idx = jnp.arange(nnodes, dtype=jnp.int32)
    scale_set = jnp.array([1.0, 0.5], dtype=jnp.float32)

    adj_set = gc(idx, scale_set)
    adj_set = [jax.block_until_ready(a) for a in adj_set]

    # Pure-JAX reference (pre-mask adjacencies) for a tolerance check on the
    # kept top-k values (tie-/rounding-robust: compares sorted kept values).
    ref_adj0 = _reference_adj0(gc.emb1[idx], gc.emb2[idx], gc.w1, gc.b1,
                               gc.w2, gc.b2, scale_set, alpha=gc.alpha)

    for adj, adj0 in zip(adj_set, ref_adj0):
        assert adj.shape == (nnodes, nnodes)
        assert bool(jnp.all(jnp.isfinite(adj)))
        assert bool(jnp.all(adj >= 0.0))
        assert bool(jnp.all(jnp.diagonal(adj) == 0.0))
        # exactly-k selection => at most k nonzero entries per row
        assert bool(jnp.all(jnp.sum(adj > 0.0, axis=1) <= topk))
        # kept values match the reference's row-wise top-k values
        kept = jnp.sort(adj, axis=1)[:, -topk:]
        want = jnp.sort(jax.lax.top_k(adj0, topk)[0], axis=1)
        assert bool(jnp.allclose(kept, want, atol=5e-3, rtol=0.0))

    print("KERNEL_OK")
</pallas_src>

<mosaic_0001>
module attributes {stable_mosaic.version = 11 : i64} {
  func.func @_graph_constructor_kernel(%arg0: i32, %arg1: memref<16x32xf32, #tpu.memory_space<vmem>>, %arg2: memref<16x32xf32, #tpu.memory_space<vmem>>, %arg3: memref<1x32x32xf32, #tpu.memory_space<vmem>>, %arg4: memref<1x1x32xf32, #tpu.memory_space<vmem>>, %arg5: memref<1x32x32xf32, #tpu.memory_space<vmem>>, %arg6: memref<1x1x32xf32, #tpu.memory_space<vmem>>, %arg7: memref<1x16x16xf32, #tpu.memory_space<vmem>>, %arg8: memref<16x32xf32, #tpu.memory_space<vmem>>, %arg9: memref<16x32xf32, #tpu.memory_space<vmem>>) attributes {dimension_semantics = [#tpu.dimension_semantics<arbitrary>], iteration_bounds = array<i64: 2>, scalar_prefetch = 0 : i64, scratch_operands = 2 : i64, tpu.core_type = #tpu.core_type<tc>, window_params = [{pipeline_mode = #tpu.pipeline_mode<synchronous>, transform_indices = @transform_0, window_bounds = array<i64: 16, 32>}, {pipeline_mode = #tpu.pipeline_mode<synchronous>, transform_indices = @transform_1, window_bounds = array<i64: 16, 32>}, {transform_indices = @transform_2, window_bounds = array<i64: 1, 32, 32>}, {transform_indices = @transform_3, window_bounds = array<i64: 1, 1, 32>}, {transform_indices = @transform_4, window_bounds = array<i64: 1, 32, 32>}, {transform_indices = @transform_5, window_bounds = array<i64: 1, 1, 32>}, {transform_indices = @transform_6, window_bounds = array<i64: 1, 16, 16>}]} {
    %c0_i32 = arith.constant 0 : i32
    %0 = arith.cmpi eq, %arg0, %c0_i32 : i32
    %1 = arith.extui %0 : i1 to i32
    %c0_i32_0 = arith.constant 0 : i32
    %2 = arith.cmpi ne, %1, %c0_i32_0 : i32
    scf.if %2 {
      %c0_49 = arith.constant 0 : index
      %c0_50 = arith.constant 0 : index
      %96 = vector.load %arg1[%c0_49, %c0_50] : memref<16x32xf32, #tpu.memory_space<vmem>>, vector<16x32xf32>
      %c0_51 = arith.constant 0 : index
      %c0_52 = arith.constant 0 : index
      %97 = vector.load %arg8[%c0_51, %c0_52] : memref<16x32xf32, #tpu.memory_space<vmem>>, vector<16x32xf32>
      tpu.vector_store %arg8[%c0_51, %c0_52], %96 {strides = array<i32>} : memref<16x32xf32, #tpu.memory_space<vmem>>, vector<16x32xf32>,
      %c0_53 = arith.constant 0 : index
      %c0_54 = arith.constant 0 : index
      %98 = vector.load %arg2[%c0_53, %c0_54] : memref<16x32xf32, #tpu.memory_space<vmem>>, vector<16x32xf32>
      %c0_55 = arith.constant 0 : index
      %c0_56 = arith.constant 0 : index
      %99 = vector.load %arg9[%c0_55, %c0_56] : memref<16x32xf32, #tpu.memory_space<vmem>>, vector<16x32xf32>
      tpu.vector_store %arg9[%c0_55, %c0_56], %98 {strides = array<i32>} : memref<16x32xf32, #tpu.memory_space<vmem>>, vector<16x32xf32>,
    } else {
    }
    %c0 = arith.constant 0 : index
    %c0_1 = arith.constant 0 : index
    %3 = vector.load %arg8[%c0, %c0_1] : memref<16x32xf32, #tpu.memory_space<vmem>>, vector<16x32xf32>
    %c0_2 = arith.constant 0 : index
    %c0_3 = arith.constant 0 : index
    %c0_4 = arith.constant 0 : index
    %4 = vector.load %arg3[%c0_2, %c0_3, %c0_4] : memref<1x32x32xf32, #tpu.memory_space<vmem>>, vector<1x32x32xf32>
    %5 = vector.shape_cast %4 : vector<1x32x32xf32> to vector<32x32xf32>
    %cst = arith.constant dense<0.000000e+00> : vector<16x32xf32>
    %6 = tpu.matmul %3, %5, %cst {dimension_numbers = #tpu.dot_dimension_numbers<[1], [0], [0], [1], [0, 0, 1, 1], [], []>, precision = #tpu.contract_precision<fp32>} : vector<16x32xf32>, vector<32x32xf32>, vector<16x32xf32> -> vector<16x32xf32>
    %c0_5 = arith.constant 0 : index
    %c0_6 = arith.constant 0 : index
    %c0_7 = arith.constant 0 : index
    %7 = vector.load %arg4[%c0_5, %c0_6, %c0_7] : memref<1x1x32xf32, #tpu.memory_space<vmem>>, vector<1x1x32xf32>
    %8 = vector.shape_cast %7 : vector<1x1x32xf32> to vector<1x32xf32>
    %9 = vector.broadcast %8 : vector<1x32xf32> to vector<16x32xf32>
    %10 = arith.addf %6, %9 : vector<16x32xf32>
    %cst_8 = arith.constant 3.000000e+00 : f32
    %11 = vector.broadcast %cst_8 : f32 to vector<16x32xf32>
    %12 = arith.mulf %11, %10 : vector<16x32xf32>
    %13 = math.tanh %12 : vector<16x32xf32>
    %c0_9 = arith.constant 0 : index
    %c0_10 = arith.constant 0 : index
    %14 = vector.load %arg9[%c0_9, %c0_10] : memref<16x32xf32, #tpu.memory_space<vmem>>, vector<16x32xf32>
    %c0_11 = arith.constant 0 : index
    %c0_12 = arith.constant 0 : index
    %c0_13 = arith.constant 0 : index
    %15 = vector.load %arg5[%c0_11, %c0_12, %c0_13] : memref<1x32x32xf32, #tpu.memory_space<vmem>>, vector<1x32x32xf32>
    %16 = vector.shape_cast %15 : vector<1x32x32xf32> to vector<32x32xf32>
    %cst_14 = arith.constant dense<0.000000e+00> : vector<16x32xf32>
    %17 = tpu.matmul %14, %16, %cst_14 {dimension_numbers = #tpu.dot_dimension_numbers<[1], [0], [0], [1], [0, 0, 1, 1], [], []>, precision = #tpu.contract_precision<fp32>} : vector<16x32xf32>, vector<32x32xf32>, vector<16x32xf32> -> vector<16x32xf32>
    %c0_15 = arith.constant 0 : index
    %c0_16 = arith.constant 0 : index
    %c0_17 = arith.constant 0 : index
    %18 = vector.load %arg6[%c0_15, %c0_16, %c0_17] : memref<1x1x32xf32, #tpu.memory_space<vmem>>, vector<1x1x32xf32>
    %19 = vector.shape_cast %18 : vector<1x1x32xf32> to vector<1x32xf32>
    %20 = vector.broadcast %19 : vector<1x32xf32> to vector<16x32xf32>
    %21 = arith.addf %17, %20 : vector<16x32xf32>
    %cst_18 = arith.constant 3.000000e+00 : f32
    %22 = vector.broadcast %cst_18 : f32 to vector<16x32xf32>
    %23 = arith.mulf %22, %21 : vector<16x32xf32>
    %24 = math.tanh %23 : vector<16x32xf32>
    %c0_19 = arith.constant 0 : index
    %c0_20 = arith.constant 0 : index
    %25 = vector.load %arg8[%c0_19, %c0_20] : memref<16x32xf32, #tpu.memory_space<vmem>>, vector<16x32xf32>
    tpu.vector_store %arg8[%c0_19, %c0_20], %13 {strides = array<i32>} : memref<16x32xf32, #tpu.memory_space<vmem>>, vector<16x32xf32>,
    %c0_21 = arith.constant 0 : index
    %c0_22 = arith.constant 0 : index
    %26 = vector.load %arg9[%c0_21, %c0_22] : memref<16x32xf32, #tpu.memory_space<vmem>>, vector<16x32xf32>
    tpu.vector_store %arg9[%c0_21, %c0_22], %24 {strides = array<i32>} : memref<16x32xf32, #tpu.memory_space<vmem>>, vector<16x32xf32>,
    %cst_23 = arith.constant dense<0.000000e+00> : vector<16x16xf32>
    %27 = tpu.matmul %13, %24, %cst_23 {dimension_numbers = #tpu.dot_dimension_numbers<[1], [1], [0], [0], [0, 0, 1, 0], [], []>, precision = #tpu.contract_precision<fp32>} : vector<16x32xf32>, vector<16x32xf32>, vector<16x16xf32> -> vector<16x16xf32>
    %28 = tpu.transpose %27, [1, 0] : vector<16x16xf32> -> vector<16x16xf32>
    %29 = arith.subf %27, %28 : vector<16x16xf32>
    %cst_24 = arith.constant 3.000000e+00 : f32
    %30 = vector.broadcast %cst_24 : f32 to vector<16x16xf32>
    %31 = arith.mulf %30, %29 : vector<16x16xf32>
    %32 = math.tanh %31 : vector<16x16xf32>
    %cst_25 = arith.constant 0.000000e+00 : f32
    %33 = vector.broadcast %cst_25 : f32 to vector<16x16xf32>
    %34 = arith.maximumf %32, %33 : vector<16x16xf32>
    %35 = tpu.iota {dimensions = array<i32: 1>} : vector<16x16xi32>
    %36 = arith.sitofp %35 : vector<16x16xi32> to vector<16x16xf32>
    %cst_26 = arith.constant 0.000000e+00 : f32
    %37 = vector.broadcast %cst_26 : f32 to vector<16x16xf32>
    %cst_27 = arith.constant dense<0xFF800000> : vector<16xf32>
    %38 = vector.multi_reduction <maximumf>, %34, %cst_27 [1] : vector<16x16xf32> to vector<16xf32>
    %39 = vector.shape_cast %38 : vector<16xf32> to vector<16x1xf32>
    %40 = vector.broadcast %39 : vector<16x1xf32> to vector<16x16xf32>
    %41 = arith.cmpf oeq, %34, %40 : vector<16x16xf32>
    %cst_28 = arith.constant 1.600000e+01 : f32
    %42 = vector.broadcast %cst_28 : f32 to vector<16x16xf32>
    %43 = arith.select %41, %36, %42 : vector<16x16xi1>, vector<16x16xf32>
    %cst_29 = arith.constant dense<0x7F800000> : vector<16xf32>
    %44 = vector.multi_reduction <minimumf>, %43, %cst_29 [1] : vector<16x16xf32> to vector<16xf32>
    %45 = vector.shape_cast %44 : vector<16xf32> to vector<16x1xf32>
    %46 = vector.broadcast %45 : vector<16x1xf32> to vector<16x16xf32>
    %47 = arith.cmpf oeq, %36, %46 : vector<16x16xf32>
    %cst_30 = arith.constant 1.000000e+00 : f32
    %48 = vector.broadcast %cst_30 : f32 to vector<16x16xf32>
    %49 = arith.select %47, %48, %37 : vector<16x16xi1>, vector<16x16xf32>
    %cst_31 = arith.constant 0xFF800000 : f32
    %50 = vector.broadcast %cst_31 : f32 to vector<16x16xf32>
    %51 = arith.select %47, %50, %34 : vector<16x16xi1>, vector<16x16xf32>
    %cst_32 = arith.constant dense<0xFF800000> : vector<16xf32>
    %52 = vector.multi_reduction <maximumf>, %51, %cst_32 [1] : vector<16x16xf32> to vector<16xf32>
    %53 = vector.shape_cast %52 : vector<16xf32> to vector<16x1xf32>
    %54 = vector.broadcast %53 : vector<16x1xf32> to vector<16x16xf32>
    %55 = arith.cmpf oeq, %51, %54 : vector<16x16xf32>
    %cst_33 = arith.constant 1.600000e+01 : f32
    %56 = vector.broadcast %cst_33 : f32 to vector<16x16xf32>
    %57 = arith.select %55, %36, %56 : vector<16x16xi1>, vector<16x16xf32>
    %cst_34 = arith.constant dense<0x7F800000> : vector<16xf32>
    %58 = vector.multi_reduction <minimumf>, %57, %cst_34 [1] : vector<16x16xf32> to vector<16xf32>
    %59 = vector.shape_cast %58 : vector<16xf32> to vector<16x1xf32>
    %60 = vector.broadcast %59 : vector<16x1xf32> to vector<16x16xf32>
    %61 = arith.cmpf oeq, %36, %60 : vector<16x16xf32>
    %cst_35 = arith.constant 1.000000e+00 : f32
    %62 = vector.broadcast %cst_35 : f32 to vector<16x16xf32>
    %63 = arith.select %61, %62, %49 : vector<16x16xi1>, vector<16x16xf32>
    %cst_36 = arith.constant 0xFF800000 : f32
    %64 = vector.broadcast %cst_36 : f32 to vector<16x16xf32>
    %65 = arith.select %61, %64, %51 : vector<16x16xi1>, vector<16x16xf32>
    %cst_37 = arith.constant dense<0xFF800000> : vector<16xf32>
    %66 = vector.multi_reduction <maximumf>, %65, %cst_37 [1] : vector<16x16xf32> to vector<16xf32>
    %67 = vector.shape_cast %66 : vector<16xf32> to vector<16x1xf32>
    %68 = vector.broadcast %67 : vector<16x1xf32> to vector<16x16xf32>
    %69 = arith.cmpf oeq, %65, %68 : vector<16x16xf32>
    %cst_38 = arith.constant 1.600000e+01 : f32
    %70 = vector.broadcast %cst_38 : f32 to vector<16x16xf32>
    %71 = arith.select %69, %36, %70 : vector<16x16xi1>, vector<16x16xf32>
    %cst_39 = arith.constant dense<0x7F800000> : vector<16xf32>
    %72 = vector.multi_reduction <minimumf>, %71, %cst_39 [1] : vector<16x16xf32> to vector<16xf32>
    %73 = vector.shape_cast %72 : vector<16xf32> to vector<16x1xf32>
    %74 = vector.broadcast %73 : vector<16x1xf32> to vector<16x16xf32>
    %75 = arith.cmpf oeq, %36, %74 : vector<16x16xf32>
    %cst_40 = arith.constant 1.000000e+00 : f32
    %76 = vector.broadcast %cst_40 : f32 to vector<16x16xf32>
    %77 = arith.select %75, %76, %63 : vector<16x16xi1>, vector<16x16xf32>
    %cst_41 = arith.constant 0xFF800000 : f32
    %78 = vector.broadcast %cst_41 : f32 to vector<16x16xf32>
    %79 = arith.select %75, %78, %65 : vector<16x16xi1>, vector<16x16xf32>
    %cst_42 = arith.constant dense<0xFF800000> : vector<16xf32>
    %80 = vector.multi_reduction <maximumf>, %79, %cst_42 [1] : vector<16x16xf32> to vector<16xf32>
    %81 = vector.shape_cast %80 : vector<16xf32> to vector<16x1xf32>
    %82 = vector.broadcast %81 : vector<16x1xf32> to vector<16x16xf32>
    %83 = arith.cmpf oeq, %79, %82 : vector<16x16xf32>
    %cst_43 = arith.constant 1.600000e+01 : f32
    %84 = vector.broadcast %cst_43 : f32 to vector<16x16xf32>
    %85 = arith.select %83, %36, %84 : vector<16x16xi1>, vector<16x16xf32>
    %cst_44 = arith.constant dense<0x7F800000> : vector<16xf32>
    %86 = vector.multi_reduction <minimumf>, %85, %cst_44 [1] : vector<16x16xf32> to vector<16xf32>
    %87 = vector.shape_cast %86 : vector<16xf32> to vector<16x1xf32>
    %88 = vector.broadcast %87 : vector<16x1xf32> to vector<16x16xf32>
    %89 = arith.cmpf oeq, %36, %88 : vector<16x16xf32>
    %cst_45 = arith.constant 1.000000e+00 : f32
    %90 = vector.broadcast %cst_45 : f32 to vector<16x16xf32>
    %91 = arith.select %89, %90, %77 : vector<16x16xi1>, vector<16x16xf32>
    %92 = arith.mulf %34, %91 : vector<16x16xf32>
    %c0_46 = arith.constant 0 : index
    %c0_47 = arith.constant 0 : index
    %c0_48 = arith.constant 0 : index
    %93 = vector.load %arg7[%c0_46, %c0_47, %c0_48] : memref<1x16x16xf32, #tpu.memory_space<vmem>>, vector<1x16x16xf32>
    %94 = vector.shape_cast %93 : vector<1x16x16xf32> to vector<16x16xf32>
    %95 = vector.shape_cast %92 : vector<16x16xf32> to vector<1x16x16xf32>
    tpu.vector_store %arg7[%c0_46, %c0_47, %c0_48], %95 {strides = array<i32>} : memref<1x16x16xf32, #tpu.memory_space<vmem>>, vector<1x16x16xf32>,
    return
  }
  func.func @transform_0(%arg0: i32) -> (i32, i32) {
    %c0_i32 = arith.constant 0 : i32
    %c0_i32_0 = arith.constant 0 : i32
    %c0_i32_1 = arith.constant 0 : i32
    return %c0_i32, %c0_i32_0 : i32, i32
  }
  func.func @transform_1(%arg0: i32) -> (i32, i32) {
    %c0_i32 = arith.constant 0 : i32
    %c0_i32_0 = arith.constant 0 : i32
    %c0_i32_1 = arith.constant 0 : i32
    return %c0_i32, %c0_i32_0 : i32, i32
  }
  func.func @transform_2(%arg0: i32) -> (i32, i32, i32) {
    %c0_i32 = arith.constant 0 : i32
    %c0_i32_0 = arith.constant 0 : i32
    %c0_i32_1 = arith.constant 0 : i32
    return %arg0, %c0_i32, %c0_i32_0 : i32, i32, i32
  }
  func.func @transform_3(%arg0: i32) -> (i32, i32, i32) {
    %c0_i32 = arith.constant 0 : i32
    %c0_i32_0 = arith.constant 0 : i32
    %c0_i32_1 = arith.constant 0 : i32
    return %arg0, %c0_i32, %c0_i32_0 : i32, i32, i32
  }
  func.func @transform_4(%arg0: i32) -> (i32, i32, i32) {
    %c0_i32 = arith.constant 0 : i32
    %c0_i32_0 = arith.constant 0 : i32
    %c0_i32_1 = arith.constant 0 : i32
    return %arg0, %c0_i32, %c0_i32_0 : i32, i32, i32
  }
  func.func @transform_5(%arg0: i32) -> (i32, i32, i32) {
    %c0_i32 = arith.constant 0 : i32
    %c0_i32_0 = arith.constant 0 : i32
    %c0_i32_1 = arith.constant 0 : i32
    return %arg0, %c0_i32, %c0_i32_0 : i32, i32, i32
  }
  func.func @transform_6(%arg0: i32) -> (i32, i32, i32) {
    %c0_i32 = arith.constant 0 : i32
    %c0_i32_0 = arith.constant 0 : i32
    %c0_i32_1 = arith.constant 0 : i32
    return %arg0, %c0_i32, %c0_i32_0 : i32, i32, i32
  }
}

</mosaic_0001>

<llo_original>
// kernel: graph_constructor_forward.1
$region0: #{graph_constructor_forward.1}
  #allocation0 [shape = 'u32[]', space=smem, size = 0x4, offset = 0x4, fixed_abs, tag = 'smem constant byte address 0x4 - core index']
  #allocation1 [shape = 'u32[144,128]{1,0:T(1,128)}', space=vmem, size = 0x12000, scoped, tag = 'internal scratch']
  #allocation2 [shape = 'f32[16,32]{1,0:T(8,128)}', space=vmem, size = 0x2000, scoped, tag = 'scratch operand']
  #allocation3 [shape = 'f32[16,32]{1,0:T(8,128)}', space=vmem, size = 0x2000, scoped, tag = 'scratch operand']
  %s0 = inlined_call_operand.vmem [shape: f32[16,32], index: 0, kind: input, shape index: {}]
  %s1 = inlined_call_operand.vmem [shape: f32[16,32], index: 1, kind: input, shape index: {}]
  %s2 = inlined_call_operand.vmem [shape: f32[2,32,32], index: 2, kind: input, shape index: {}]
  %s3 = inlined_call_operand.vmem [shape: f32[2,1,32], index: 3, kind: input, shape index: {}]
  %s4 = inlined_call_operand.vmem [shape: f32[2,32,32], index: 4, kind: input, shape index: {}]
  %s5 = inlined_call_operand.vmem [shape: f32[2,1,32], index: 5, kind: input, shape index: {}]
  %s6 = inlined_call_operand.hbm [shape: f32[2,16,16], index: 6, kind: output, shape index: {}]
  %s7 = sld [smem:[#allocation0]]
  $region61: #{graph_constructor_forward.1} parent=0
    _
  %s9 = ssub.s32 1, %s7
  %s10 = scalar_select 0, %s9, %s7
  $region1: #{graph_constructor_forward.1} parent=0
    #allocation4 [shape = 'u8[16384]{0}', space=vmem, size = 0x4000, scoped, tag = 'output window, operand 0']
    #allocation5 [shape = 's32[2]{0}', space=sflag, size = 0x8, scoped, tag = 'scoped memory for graph_constructor_forward.1']
    %11 = vsyncpa [#allocation5], 0
    %s12 = scalar_lea.sflag [#allocation5], 1
    %13 = vsyncpa %s12, 0
    loop: start=0, step=1, limit=4
    $region2: #{graph_constructor_forward.1} parent=1 // loop_pre_header
      _
    $region3: #{graph_constructor_forward.1} parent=1 // loop_header
      %s15 = sphi 0, %s19
      %p16 = scmp.ge.s32.totalorder %s15, 4
      %s23 = sphi 0, %s23
      %s25 = sphi 0, %s23
      %s26 = sphi 0, %s25
      %s40 = sphi 0, %s26
      %s44 = sphi 0, %s44
      %s46 = sphi 0, %s44
      %s47 = sphi 0, %s46
      %s61 = sphi 0, %s47
      %s67 = sphi 0, %s69
      %s70 = sphi 0, %s67
      %s71 = sphi 0, %s70
      %s87 = sphi 0, %s71
      %s93 = sphi 0, %s95
      %s96 = sphi 0, %s93
      %s97 = sphi 0, %s96
      %s113 = sphi 0, %s97
      %s119 = sphi 0, %s121
      %s122 = sphi 0, %s119
      %s123 = sphi 0, %s122
      %s139 = sphi 0, %s123
      %s145 = sphi 0, %s147
      %s148 = sphi 0, %s145
      %s149 = sphi 0, %s148
      %s165 = sphi 0, %s149
      %s171 = sphi 0, %s173
      %s174 = sphi 0, %s171
      %s175 = sphi 0, %s174
      %s191 = sphi 0, %s175
    $region4: #{graph_constructor_forward.1} parent=1 // loop_header_branch
      %18 = sbr.rel (%p16) target = $region8
    $region5: #{graph_constructor_forward.1} parent=1 // loop_body
      %s20 = ssub.s32 %s15, 1
      %s21 = ssub.s32 %s15, 2
      %s22 = sadd.s32 %s15, 1
      %s24 = sadd.s32 %s23, 1
      %p27 = scmp.eq.s32.totalorder %s15, 1
      %p28 = scmp.ne.s32.totalorder %s23, %s25
      %p29 = scmp.eq.s32.totalorder %s15, 0
      %p30 = por %p28, %p29
      %p31 = scmp.ne.s32.totalorder %s23, %s25
      %p32 = scmp.eq.s32.totalorder %s20, 1
      %p33 = por %p31, %p32
      %p34 = scmp.ne.s32.totalorder %s25, %s26
      %p35 = scmp.eq.s32.totalorder %s20, 0
      %p36 = por %p34, %p35
      %p37 = scmp.ne.s32.totalorder %s25, %s26
      %p38 = scmp.eq.s32.totalorder %s21, 1
      %p39 = por %p37, %p38
      %p41 = scmp.ne.s32.totalorder %s26, %s40
      %p42 = scmp.eq.s32.totalorder %s21, 0
      %p43 = por %p41, %p42
      %s45 = sadd.s32 %s44, 1
      %p48 = scmp.eq.s32.totalorder %s15, 1
      %p49 = scmp.ne.s32.totalorder %s44, %s46
      %p50 = scmp.eq.s32.totalorder %s15, 0
      %p51 = por %p49, %p50
      %p52 = scmp.ne.s32.totalorder %s44, %s46
      %p53 = scmp.eq.s32.totalorder %s20, 1
      %p54 = por %p52, %p53
      %p55 = scmp.ne.s32.totalorder %s46, %s47
      %p56 = scmp.eq.s32.totalorder %s20, 0
      %p57 = por %p55, %p56
      %p58 = scmp.ne.s32.totalorder %s46, %s47
      %p59 = scmp.eq.s32.totalorder %s21, 1
      %p60 = por %p58, %p59
      %p62 = scmp.ne.s32.totalorder %s47, %s61
      %p63 = scmp.eq.s32.totalorder %s21, 0
      %p64 = por %p62, %p63
      %s65 = ssub.s32 %s15, %s22
      %p66 = scmp.eq.s32.totalorder %s65, 0
      %s68 = sadd.s32 %s67, 1
      %s69 = scalar_select %p66, %s67, %s68
      %p72 = pneg %p66
      %p73 = scmp.eq.s32.totalorder %s15, 1
      %p74 = por %p72, %p73
      %p75 = scmp.ne.s32.totalorder %s67, %s70
      %p76 = scmp.eq.s32.totalorder %s15, 0
      %p77 = por %p75, %p76
      %p78 = scmp.ne.s32.totalorder %s67, %s70
      %p79 = scmp.eq.s32.totalorder %s20, 1
      %p80 = por %p78, %p79
      %p81 = scmp.ne.s32.totalorder %s70, %s71
      %p82 = scmp.eq.s32.totalorder %s20, 0
      %p83 = por %p81, %p82
      %p84 = scmp.ne.s32.totalorder %s70, %s71
      %p85 = scmp.eq.s32.totalorder %s21, 1
      %p86 = por %p84, %p85
      %p88 = scmp.ne.s32.totalorder %s71, %s87
      %p89 = scmp.eq.s32.totalorder %s21, 0
      %p90 = por %p88, %p89
      %s91 = ssub.s32 %s15, %s22
      %p92 = scmp.eq.s32.totalorder %s91, 0
      %s94 = sadd.s32 %s93, 1
      %s95 = scalar_select %p92, %s93, %s94
      %p98 = pneg %p92
      %p99 = scmp.eq.s32.totalorder %s15, 1
      %p100 = por %p98, %p99
      %p101 = scmp.ne.s32.totalorder %s93, %s96
      %p102 = scmp.eq.s32.totalorder %s15, 0
      %p103 = por %p101, %p102
      %p104 = scmp.ne.s32.totalorder %s93, %s96
      %p105 = scmp.eq.s32.totalorder %s20, 1
      %p106 = por %p104, %p105
      %p107 = scmp.ne.s32.totalorder %s96, %s97
      %p108 = scmp.eq.s32.totalorder %s20, 0
      %p109 = por %p107, %p108
      %p110 = scmp.ne.s32.totalorder %s96, %s97
      %p111 = scmp.eq.s32.totalorder %s21, 1
      %p112 = por %p110, %p111
      %p114 = scmp.ne.s32.totalorder %s97, %s113
      %p115 = scmp.eq.s32.totalorder %s21, 0
      %p116 = por %p114, %p115
      %s117 = ssub.s32 %s15, %s22
      %p118 = scmp.eq.s32.totalorder %s117, 0
      %s120 = sadd.s32 %s119, 1
      %s121 = scalar_select %p118, %s119, %s120
      %p124 = pneg %p118
      %p125 = scmp.eq.s32.totalorder %s15, 1
      %p126 = por %p124, %p125
      %p127 = scmp.ne.s32.totalorder %s119, %s122
      %p128 = scmp.eq.s32.totalorder %s15, 0
      %p129 = por %p127, %p128
      %p130 = scmp.ne.s32.totalorder %s119, %s122
      %p131 = scmp.eq.s32.totalorder %s20, 1
      %p132 = por %p130, %p131
      %p133 = scmp.ne.s32.totalorder %s122, %s123
      %p134 = scmp.eq.s32.totalorder %s20, 0
      %p135 = por %p133, %p134
      %p136 = scmp.ne.s32.totalorder %s122, %s123
      %p137 = scmp.eq.s32.totalorder %s21, 1
      %p138 = por %p136, %p137
      %p140 = scmp.ne.s32.totalorder %s123, %s139
      %p141 = scmp.eq.s32.totalorder %s21, 0
      %p142 = por %p140, %p141
      %s143 = ssub.s32 %s15, %s22
      %p144 = scmp.eq.s32.totalorder %s143, 0
      %s146 = sadd.s32 %s145, 1
      %s147 = scalar_select %p144, %s145, %s146
      %p150 = pneg %p144
      %p151 = scmp.eq.s32.totalorder %s15, 1
      %p152 = por %p150, %p151
      %p153 = scmp.ne.s32.totalorder %s145, %s148
      %p154 = scmp.eq.s32.totalorder %s15, 0
      %p155 = por %p153, %p154
      %p156 = scmp.ne.s32.totalorder %s145, %s148
      %p157 = scmp.eq.s32.totalorder %s20, 1
      %p158 = por %p156, %p157
      %p159 = scmp.ne.s32.totalorder %s148, %s149
      %p160 = scmp.eq.s32.totalorder %s20, 0
      %p161 = por %p159, %p160
      %p162 = scmp.ne.s32.totalorder %s148, %s149
      %p163 = scmp.eq.s32.totalorder %s21, 1
      %p164 = por %p162, %p163
      %p166 = scmp.ne.s32.totalorder %s149, %s165
      %p167 = scmp.eq.s32.totalorder %s21, 0
      %p168 = por %p166, %p167
      %s169 = ssub.s32 %s15, %s22
      %p170 = scmp.eq.s32.totalorder %s169, 0
      %s172 = sadd.s32 %s171, 1
      %s173 = scalar_select %p170, %s171, %s172
      %p176 = pneg %p170
      %p177 = scmp.eq.s32.totalorder %s15, 1
      %p178 = por %p176, %p177
      %p179 = scmp.ne.s32.totalorder %s171, %s174
      %p180 = scmp.eq.s32.totalorder %s15, 0
      %p181 = por %p179, %p180
      %p182 = scmp.ne.s32.totalorder %s171, %s174
      %p183 = scmp.eq.s32.totalorder %s20, 1
      %p184 = por %p182, %p183
      %p185 = scmp.ne.s32.totalorder %s174, %s175
      %p186 = scmp.eq.s32.totalorder %s20, 0
      %p187 = por %p185, %p186
      %p188 = scmp.ne.s32.totalorder %s174, %s175
      %p189 = scmp.eq.s32.totalorder %s21, 1
      %p190 = por %p188, %p189
      %p192 = scmp.ne.s32.totalorder %s175, %s191
      %p193 = scmp.eq.s32.totalorder %s21, 0
      %p194 = por %p192, %p193
      %p195 = scmp.le.s32.totalorder 1, %s15
      %p196 = scmp.lt.s32.totalorder %s15, 3
      %p197 = pnand %p195, %p196
      %p198 = pneg %p197
      // Predicated region
      $region9: #{graph_constructor_forward.1} parent=5 // pred_check
        _
      $region10: #{graph_constructor_forward.1} parent=5 // pred_check_branch
        %200 = sbr.rel (%p197) target = $region12
      $region11: #{graph_constructor_forward.1} parent=5 // pred_region
        %s201 = ssub.s32 %s15, 1
        // Predicated region
        $region13: #{graph_constructor_forward.1} parent=11 // pred_check
          %p202 = pneg %p36
        $region14: #{graph_constructor_forward.1} parent=11 // pred_check_branch
          %204 = sbr.rel (%p202) target = $region16
        $region15: #{graph_constructor_forward.1} parent=11 // pred_region
          _
        $region16: #{graph_constructor_forward.1} parent=11 // pred_fallthru
          _
        // Predicated region
        $region17: #{graph_constructor_forward.1} parent=11 // pred_check
          %p205 = pneg %p57
        $region18: #{graph_constructor_forward.1} parent=11 // pred_check_branch
          %207 = sbr.rel (%p205) target = $region20
        $region19: #{graph_constructor_forward.1} parent=11 // pred_region
          _
        $region20: #{graph_constructor_forward.1} parent=11 // pred_fallthru
          _
      $region12: #{graph_constructor_forward.1} parent=5 // pred_fallthru
        _
      %p208 = scmp.lt.s32.totalorder %s15, 2
      // Predicated region
      $region21: #{graph_constructor_forward.1} parent=5 // pred_check
        %p209 = pneg %p208
      $region22: #{graph_constructor_forward.1} parent=5 // pred_check_branch
        %211 = sbr.rel (%p209) target = $region24
      $region23: #{graph_constructor_forward.1} parent=5 // pred_region
        // Predicated region
        $region25: #{graph_constructor_forward.1} parent=23 // pred_check
          %p212 = pneg %p77
        $region26: #{graph_constructor_forward.1} parent=23 // pred_check_branch
          %214 = sbr.rel (%p212) target = $region28
        $region27: #{graph_constructor_forward.1} parent=23 // pred_region
          %p215 = scmp.lt.s32.totalorder %s15, 1
          %s216 = scalar_select %p215, %s15, 1
          %s217 = smul.addr %s216, 4
          %s218 = smul.addr %s217, 8
          %s219 = scalar_lea.vmem %s2, %s218
        $region28: #{graph_constructor_forward.1} parent=23 // pred_fallthru
          _
        // Predicated region
        $region29: #{graph_constructor_forward.1} parent=23 // pred_check
          %p220 = pneg %p103
        $region30: #{graph_constructor_forward.1} parent=23 // pred_check_branch
          %222 = sbr.rel (%p220) target = $region32
        $region31: #{graph_constructor_forward.1} parent=23 // pred_region
          %p223 = scmp.lt.s32.totalorder %s15, 1
          %s224 = scalar_select %p223, %s15, 1
          %s225 = scalar_lea.vmem %s3, %s224
        $region32: #{graph_constructor_forward.1} parent=23 // pred_fallthru
          _
        // Predicated region
        $region33: #{graph_constructor_forward.1} parent=23 // pred_check
          %p226 = pneg %p129
        $region34: #{graph_constructor_forward.1} parent=23 // pred_check_branch
          %228 = sbr.rel (%p226) target = $region36
        $region35: #{graph_constructor_forward.1} parent=23 // pred_region
          %p229 = scmp.lt.s32.totalorder %s15, 1
          %s230 = scalar_select %p229, %s15, 1
          %s231 = smul.addr %s230, 4
          %s232 = smul.addr %s231, 8
          %s233 = scalar_lea.vmem %s4, %s232
        $region36: #{graph_constructor_forward.1} parent=23 // pred_fallthru
          _
        // Predicated region
        $region37: #{graph_constructor_forward.1} parent=23 // pred_check
          %p234 = pneg %p155
        $region38: #{graph_constructor_forward.1} parent=23 // pred_check_branch
          %236 = sbr.rel (%p234) target = $region40
        $region39: #{graph_constructor_forward.1} parent=23 // pred_region
          %p237 = scmp.lt.s32.totalorder %s15, 1
          %s238 = scalar_select %p237, %s15, 1
          %s239 = scalar_lea.vmem %s5, %s238
        $region40: #{graph_constructor_forward.1} parent=23 // pred_fallthru
          _
      $region24: #{graph_constructor_forward.1} parent=5 // pred_fallthru
        _
      %p240 = scmp.le.s32.totalorder 1, %s15
      %p241 = scmp.lt.s32.totalorder %s15, 3
      %p242 = pnand %p240, %p241
      %p243 = pneg %p242
      // Predicated region
      $region41: #{graph_constructor_forward.1} parent=5 // pred_check
        _
      $region42: #{graph_constructor_forward.1} parent=5 // pred_check_branch
        %245 = sbr.rel (%p242) target = $region44
      $region43: #{graph_constructor_forward.1} parent=5 // pred_region
        %s246 = ssub.s32 %s15, 1
        %p247 = pneg %p36
        %p248 = pneg %p33
        %p249 = pneg %p57
        %p250 = pneg %p54
        %p251 = scmp.lt.s32.totalorder %s20, 1
        %s252 = scalar_select %p251, %s20, 1
        %s253 = smul.addr %s252, 4
        %s254 = smul.addr %s253, 8
        %s255 = scalar_lea.vmem %s2, %s254
        %p256 = pneg %p83
        %p257 = pneg %p80
        %p258 = scmp.lt.s32.totalorder %s20, 1
        %s259 = scalar_select %p258, %s20, 1
        %s260 = scalar_lea.vmem %s3, %s259
        %p261 = pneg %p109
        %p262 = pneg %p106
        %p263 = scmp.lt.s32.totalorder %s20, 1
        %s264 = scalar_select %p263, %s20, 1
        %s265 = smul.addr %s264, 4
        %s266 = smul.addr %s265, 8
        %s267 = scalar_lea.vmem %s4, %s266
        %p268 = pneg %p135
        %p269 = pneg %p132
        %p270 = scmp.lt.s32.totalorder %s20, 1
        %s271 = scalar_select %p270, %s20, 1
        %s272 = scalar_lea.vmem %s5, %s271
        %p273 = pneg %p161
        %p274 = pneg %p158
        %p275 = pneg %p187
        %p276 = pneg %p184
        %s277 = sand.u32 %s174, 1
        %s278 = scalar_lea.sflag [#allocation5], %s277
        %s279 = sand.u32 %s174, 1
        %s280 = smul.addr %s279, 16
        %s281 = scalar_lea.vmem [#allocation4], %s280
        %p282 = scmp.lt.s32.totalorder %s20, 1
        %s283 = scalar_select %p282, %s20, 1
        %s284 = smul.addr %s283, 4
        %s285 = smul.addr %s284, 8
        %s286 = scalar_lea.vmem %s2, %s285
        %p287 = scmp.lt.s32.totalorder %s20, 1
        %s288 = scalar_select %p287, %s20, 1
        %s289 = scalar_lea.vmem %s3, %s288
        %p290 = scmp.lt.s32.totalorder %s20, 1
        %s291 = scalar_select %p290, %s20, 1
        %s292 = smul.addr %s291, 4
        %s293 = smul.addr %s292, 8
        %s294 = scalar_lea.vmem %s4, %s293
        %p295 = scmp.lt.s32.totalorder %s20, 1
        %s296 = scalar_select %p295, %s20, 1
        %s297 = scalar_lea.vmem %s5, %s296
        %p298 = scmp.eq.s32.totalorder %s20, 0
        // Predicated region
        $region45: #{graph_constructor_forward.1} parent=43 // pred_check
          %p299 = pneg %p298
        $region46: #{graph_constructor_forward.1} parent=43 // pred_check_branch
          %301 = sbr.rel (%p299) target = $region48
        $region47: #{graph_constructor_forward.1} parent=43 // pred_region
          %v302 = vld [vmem:[%s0] sm:$0xff]
          %v303 = vld [vmem:[%s0 + $0x8] sm:$0xff]
          %vm304 = vcmask 261120
          %305 = vst.msk [vmem:[#allocation2] sm:$0xff] %vm304, %v302
          %306 = vst.msk [vmem:[#allocation2 + $0x8] sm:$0xff] %vm304, %v303
          %v307 = vld [vmem:[%s1] sm:$0xff]
          %v308 = vld [vmem:[%s1 + $0x8] sm:$0xff]
          %309 = vst.msk [vmem:[#allocation3] sm:$0xff] %vm304, %v307
          %310 = vst.msk [vmem:[#allocation3 + $0x8] sm:$0xff] %vm304, %v308
        $region48: #{graph_constructor_forward.1} parent=43 // pred_fallthru
          _
        %v311 = vld [vmem:[#allocation2] sm:$0xff]
        %v312 = vld [vmem:[#allocation2 + $0x8] sm:$0xff]
        %v313 = vld [vmem:[%s286] sm:$0xff]
        %v314 = vld [vmem:[%s286 + $0x8] sm:$0xff]
        %v315 = vld [vmem:[%s286 + $0x10] sm:$0xff]
        %v316 = vld [vmem:[%s286 + $0x18] sm:$0xff]
        %v317 = vld [vmem:[%s289] sm:$0x1]
        %v319 = vlaneseq
        %v320 = vshrl.u32 %v319, 7
        %v321 = vsub.s32 0, %v320
        %v322 = vrot.slane %v317, %v321
        %vm324 = vcmask 261120
        %v326 = vsel %vm324, %v311, 0
        %v329 = vsel %vm324, %v312, 0
        %331 = vmatprep.subr.mxu0 0.0
        %332 = vmatpush1.msra.mxu0 0.0
        %333 = vmatprep.subr.mxu0 0.0
        %334 = vmatpush1.msra.mxu0 0.0
        %335 = vmatprep.subr.mxu0 0.0
        %336 = vmatpush1.msra.mxu0 0.0
        %337 = vmatprep.subr.mxu0 0.0
        %338 = vmatpush1.msra.mxu0 0.0
        %339 = vmatprep.subr.mxu0 0.0
        %340 = vmatpush1.msra.mxu0 0.0
        %341 = vmatprep.subr.mxu0 0.0
        %342 = vmatpush1.msra.mxu0 0.0
        %343 = vmatprep.subr.mxu0 0.0
        %344 = vmatpush1.msra.mxu0 0.0
        %345 = vmatprep.subr.mxu0 0.0
        %346 = vmatpush1.msra.mxu0 0.0
        %347 = vmatprep.subr.mxu0 0.0
        %348 = vmatpush1.msra.mxu0 0.0
        %349 = vmatprep.subr.mxu0 0.0
        %350 = vmatpush1.msra.mxu0 0.0
        %351 = vmatprep.subr.mxu0 0.0
        %352 = vmatpush1.msra.mxu0 0.0
        %353 = vmatprep.subr.mxu0 0.0
        %354 = vmatpush1.msra.mxu0 0.0
        %355 = vmatprep.subr.mxu0 0.0
        %v356 = vand.u32 %v316, 4294901760
        %357 = vmatpush1.msra.mxu0 %v356
        %358 = vmatprep.subr.mxu0 0.0
        %v359 = vand.u32 %v315, 4294901760
        %360 = vmatpush1.msra.mxu0 %v359
        %361 = vmatprep.subr.mxu0 0.0
        %v362 = vand.u32 %v314, 4294901760
        %363 = vmatpush1.msra.mxu0 %v362
        %364 = vmatprep.subr.mxu0 0.0
        %v365 = vand.u32 %v313, 4294901760
        %366 = vmatpush1.msra.mxu0 %v365
        %367 = vmatprep.subr.mxu0 0.0
        %368 = vmatpush2.msra.mxu0 0.0
        %369 = vmatprep.subr.mxu0 0.0
        %370 = vmatpush2.msra.mxu0 0.0
        %371 = vmatprep.subr.mxu0 0.0
        %372 = vmatpush2.msra.mxu0 0.0
        %373 = vmatprep.subr.mxu0 0.0
        %374 = vmatpush2.msra.mxu0 0.0
        %375 = vmatprep.subr.mxu0 0.0
        %376 = vmatpush2.msra.mxu0 0.0
        %377 = vmatprep.subr.mxu0 0.0
        %378 = vmatpush2.msra.mxu0 0.0
        %379 = vmatprep.subr.mxu0 0.0
        %380 = vmatpush2.msra.mxu0 0.0
        %381 = vmatprep.subr.mxu0 0.0
        %382 = vmatpush2.msra.mxu0 0.0
        %383 = vmatprep.subr.mxu0 0.0
        %384 = vmatpush2.msra.mxu0 0.0
        %385 = vmatprep.subr.mxu0 0.0
        %386 = vmatpush2.msra.mxu0 0.0
        %387 = vmatprep.subr.mxu0 0.0
        %388 = vmatpush2.msra.mxu0 0.0
        %389 = vmatprep.subr.mxu0 0.0
        %390 = vmatpush2.msra.mxu0 0.0
        %391 = vmatprep.subr.mxu0 0.0
        %392 = vmatpush2.msra.mxu0 0.0
        %393 = vmatprep.subr.mxu0 0.0
        %394 = vmatpush2.msra.mxu0 0.0
        %395 = vmatprep.subr.mxu0 0.0
        %396 = vmatpush2.msra.mxu0 0.0
        %397 = vmatprep.subr.mxu0 0.0
        %398 = vmatpush2.msra.mxu0 0.0
        %399 = vmatprep.mubr.f32.mxu0 0.0
        %v400 = vand.u32 %v326, 4294901760
        %v401 = vsub.f32 %v326, %v400
        %v402 = vand.u32 %v401, 4294901760
        %v403 = vsub.f32 %v401, %v402
        %v404 = vand.u32 %v403, 4294901760
        %405 = vmatmul.mubr.f32.gmra.mxu0 %v404
        %v406 = vpop.f32.mrf.mxu0
        %v407 = vadd.f32 %v322, %v406
        %v408 = vpop.f32.mrf.mxu0
        %409 = vmatprep.mubr.f32.mxu0 0.0
        %v410 = vand.u32 %v329, 4294901760
        %v411 = vsub.f32 %v329, %v410
        %v412 = vand.u32 %v411, 4294901760
        %v413 = vsub.f32 %v411, %v412
        %v414 = vand.u32 %v413, 4294901760
        %415 = vmatmul.mubr.f32.gmra.mxu0 %v414
        %v416 = vpop.f32.mrf.mxu0
        %v417 = vadd.f32 %v322, %v416
        %v418 = vpop.f32.mrf.mxu0
        %419 = vdwg.mxu0
        %420 = vmatprep.subr.mxu0 0.0
        %421 = vmatpush1.msra.mxu0 0.0
        %422 = vmatprep.subr.mxu0 0.0
        %423 = vmatpush1.msra.mxu0 0.0
        %424 = vmatprep.subr.mxu0 0.0
        %425 = vmatpush1.msra.mxu0 0.0
        %426 = vmatprep.subr.mxu0 0.0
        %427 = vmatpush1.msra.mxu0 0.0
        %428 = vmatprep.subr.mxu0 0.0
        %429 = vmatpush1.msra.mxu0 0.0
        %430 = vmatprep.subr.mxu0 0.0
        %431 = vmatpush1.msra.mxu0 0.0
        %432 = vmatprep.subr.mxu0 0.0
        %433 = vmatpush1.msra.mxu0 0.0
        %434 = vmatprep.subr.mxu0 0.0
        %435 = vmatpush1.msra.mxu0 0.0
        %436 = vmatprep.subr.mxu0 0.0
        %437 = vmatpush1.msra.mxu0 0.0
        %438 = vmatprep.subr.mxu0 0.0
        %439 = vmatpush1.msra.mxu0 0.0
        %440 = vmatprep.subr.mxu0 0.0
        %441 = vmatpush1.msra.mxu0 0.0
        %442 = vmatprep.subr.mxu0 0.0
        %443 = vmatpush1.msra.mxu0 0.0
        %444 = vmatprep.subr.mxu0 0.0
        %v445 = vand.u32 %v316, 4294901760
        %v446 = vsub.f32 %v316, %v445
        %v447 = vand.u32 %v446, 4294901760
        %v448 = vsub.f32 %v446, %v447
        %v449 = vand.u32 %v448, 4294901760
        %450 = vmatpush1.msra.mxu0 %v449
        %451 = vmatprep.subr.mxu0 0.0
        %v452 = vand.u32 %v315, 4294901760
        %v453 = vsub.f32 %v315, %v452
        %v454 = vand.u32 %v453, 4294901760
        %v455 = vsub.f32 %v453, %v454
        %v456 = vand.u32 %v455, 4294901760
        %457 = vmatpush1.msra.mxu0 %v456
        %458 = vmatprep.subr.mxu0 0.0
        %v459 = vand.u32 %v314, 4294901760
        %v460 = vsub.f32 %v314, %v459
        %v461 = vand.u32 %v460, 4294901760
        %v462 = vsub.f32 %v460, %v461
        %v463 = vand.u32 %v462, 4294901760
        %464 = vmatpush1.msra.mxu0 %v463
        %465 = vmatprep.subr.mxu0 0.0
        %v466 = vand.u32 %v313, 4294901760
        %v467 = vsub.f32 %v313, %v466
        %v468 = vand.u32 %v467, 4294901760
        %v469 = vsub.f32 %v467, %v468
        %v470 = vand.u32 %v469, 4294901760
        %471 = vmatpush1.msra.mxu0 %v470
        %472 = vmatprep.subr.mxu0 0.0
        %473 = vmatpush2.msra.mxu0 0.0
        %474 = vmatprep.subr.mxu0 0.0
        %475 = vmatpush2.msra.mxu0 0.0
        %476 = vmatprep.subr.mxu0 0.0
        %477 = vmatpush2.msra.mxu0 0.0
        %478 = vmatprep.subr.mxu0 0.0
        %479 = vmatpush2.msra.mxu0 0.0
        %480 = vmatprep.subr.mxu0 0.0
        %481 = vmatpush2.msra.mxu0 0.0
        %482 = vmatprep.subr.mxu0 0.0
        %483 = vmatpush2.msra.mxu0 0.0
        %484 = vmatprep.subr.mxu0 0.0
        %485 = vmatpush2.msra.mxu0 0.0
        %486 = vmatprep.subr.mxu0 0.0
        %487 = vmatpush2.msra.mxu0 0.0
        %488 = vmatprep.subr.mxu0 0.0
        %489 = vmatpush2.msra.mxu0 0.0
        %490 = vmatprep.subr.mxu0 0.0
        %491 = vmatpush2.msra.mxu0 0.0
        %492 = vmatprep.subr.mxu0 0.0
        %493 = vmatpush2.msra.mxu0 0.0
        %494 = vmatprep.subr.mxu0 0.0
        %495 = vmatpush2.msra.mxu0 0.0
        %496 = vmatprep.subr.mxu0 0.0
        %497 = vmatpush2.msra.mxu0 0.0
        %498 = vmatprep.subr.mxu0 0.0
        %499 = vmatpush2.msra.mxu0 0.0
        %500 = vmatprep.subr.mxu0 0.0
        %501 = vmatpush2.msra.mxu0 0.0
        %502 = vmatprep.subr.mxu0 0.0
        %503 = vmatpush2.msra.mxu0 0.0
        %504 = vmatprep.mubr.f32.mxu0 0.0
        %v505 = vand.u32 %v326, 4294901760
        %506 = vmatmul.mubr.f32.gmra.mxu0 %v505
        %v507 = vpop.f32.mrf.mxu0
        %v508 = vadd.f32 %v407, %v507
        %v509 = vpop.f32.mrf.mxu0
        %510 = vmatprep.mubr.f32.mxu0 0.0
        %v511 = vand.u32 %v329, 4294901760
        %512 = vmatmul.mubr.f32.gmra.mxu0 %v511
        %v513 = vpop.f32.mrf.mxu0
        %v514 = vadd.f32 %v417, %v513
        %v515 = vpop.f32.mrf.mxu0
        %516 = vdwg.mxu0
        %517 = vmatprep.subr.mxu0 0.0
        %518 = vmatpush1.msra.mxu0 0.0
        %519 = vmatprep.subr.mxu0 0.0
        %520 = vmatpush1.msra.mxu0 0.0
        %521 = vmatprep.subr.mxu0 0.0
        %522 = vmatpush1.msra.mxu0 0.0
        %523 = vmatprep.subr.mxu0 0.0
        %524 = vmatpush1.msra.mxu0 0.0
        %525 = vmatprep.subr.mxu0 0.0
        %526 = vmatpush1.msra.mxu0 0.0
        %527 = vmatprep.subr.mxu0 0.0
        %528 = vmatpush1.msra.mxu0 0.0
        %529 = vmatprep.subr.mxu0 0.0
        %530 = vmatpush1.msra.mxu0 0.0
        %531 = vmatprep.subr.mxu0 0.0
        %532 = vmatpush1.msra.mxu0 0.0
        %533 = vmatprep.subr.mxu0 0.0
        %534 = vmatpush1.msra.mxu0 0.0
        %535 = vmatprep.subr.mxu0 0.0
        %536 = vmatpush1.msra.mxu0 0.0
        %537 = vmatprep.subr.mxu0 0.0
        %538 = vmatpush1.msra.mxu0 0.0
        %539 = vmatprep.subr.mxu0 0.0
        %540 = vmatpush1.msra.mxu0 0.0
        %541 = vmatprep.subr.mxu0 0.0
        %v542 = vand.u32 %v316, 4294901760
        %v543 = vsub.f32 %v316, %v542
        %544 = vmatpush1.msra.mxu0 %v543
        %545 = vmatprep.subr.mxu0 0.0
        %v546 = vand.u32 %v315, 4294901760
        %v547 = vsub.f32 %v315, %v546
        %548 = vmatpush1.msra.mxu0 %v547
        %549 = vmatprep.subr.mxu0 0.0
        %v550 = vand.u32 %v314, 4294901760
        %v551 = vsub.f32 %v314, %v550
        %552 = vmatpush1.msra.mxu0 %v551
        %553 = vmatprep.subr.mxu0 0.0
        %v554 = vand.u32 %v313, 4294901760
        %v555 = vsub.f32 %v313, %v554
        %556 = vmatpush1.msra.mxu0 %v555
        %557 = vmatprep.subr.mxu0 0.0
        %558 = vmatpush2.msra.mxu0 0.0
        %559 = vmatprep.subr.mxu0 0.0
        %560 = vmatpush2.msra.mxu0 0.0
        %561 = vmatprep.subr.mxu0 0.0
        %562 = vmatpush2.msra.mxu0 0.0
        %563 = vmatprep.subr.mxu0 0.0
        %564 = vmatpush2.msra.mxu0 0.0
        %565 = vmatprep.subr.mxu0 0.0
        %566 = vmatpush2.msra.mxu0 0.0
        %567 = vmatprep.subr.mxu0 0.0
        %568 = vmatpush2.msra.mxu0 0.0
        %569 = vmatprep.subr.mxu0 0.0
        %570 = vmatpush2.msra.mxu0 0.0
        %571 = vmatprep.subr.mxu0 0.0
        %572 = vmatpush2.msra.mxu0 0.0
        %573 = vmatprep.subr.mxu0 0.0
        %574 = vmatpush2.msra.mxu0 0.0
        %575 = vmatprep.subr.mxu0 0.0
        %576 = vmatpush2.msra.mxu0 0.0
        %577 = vmatprep.subr.mxu0 0.0
        %578 = vmatpush2.msra.mxu0 0.0
        %579 = vmatprep.subr.mxu0 0.0
        %580 = vmatpush2.msra.mxu0 0.0
        %581 = vmatprep.subr.mxu0 0.0
        %582 = vmatpush2.msra.mxu0 0.0
        %583 = vmatprep.subr.mxu0 0.0
        %584 = vmatpush2.msra.mxu0 0.0
        %585 = vmatprep.subr.mxu0 0.0
        %586 = vmatpush2.msra.mxu0 0.0
        %587 = vmatprep.subr.mxu0 0.0
        %588 = vmatpush2.msra.mxu0 0.0
        %589 = vmatprep.mubr.f32.mxu0 0.0
        %v590 = vand.u32 %v326, 4294901760
        %v591 = vsub.f32 %v326, %v590
        %592 = vmatmul.mubr.f32.gmra.mxu0 %v591
        %v593 = vpop.f32.mrf.mxu0
        %v594 = vadd.f32 %v508, %v593
        %v595 = vpop.f32.mrf.mxu0
        %596 = vmatprep.mubr.f32.mxu0 0.0
        %v597 = vand.u32 %v329, 4294901760
        %v598 = vsub.f32 %v329, %v597
        %599 = vmatmul.mubr.f32.gmra.mxu0 %v598
        %v600 = vpop.f32.mrf.mxu0
        %v601 = vadd.f32 %v514, %v600
        %v602 = vpop.f32.mrf.mxu0
        %603 = vdwg.mxu0
        %604 = vmatprep.subr.mxu0 0.0
        %605 = vmatpush1.msra.mxu0 0.0
        %606 = vmatprep.subr.mxu0 0.0
        %607 = vmatpush1.msra.mxu0 0.0
        %608 = vmatprep.subr.mxu0 0.0
        %609 = vmatpush1.msra.mxu0 0.0
        %610 = vmatprep.subr.mxu0 0.0
        %611 = vmatpush1.msra.mxu0 0.0
        %612 = vmatprep.subr.mxu0 0.0
        %613 = vmatpush1.msra.mxu0 0.0
        %614 = vmatprep.subr.mxu0 0.0
        %615 = vmatpush1.msra.mxu0 0.0
        %616 = vmatprep.subr.mxu0 0.0
        %617 = vmatpush1.msra.mxu0 0.0
        %618 = vmatprep.subr.mxu0 0.0
        %619 = vmatpush1.msra.mxu0 0.0
        %620 = vmatprep.subr.mxu0 0.0
        %621 = vmatpush1.msra.mxu0 0.0
        %622 = vmatprep.subr.mxu0 0.0
        %623 = vmatpush1.msra.mxu0 0.0
        %624 = vmatprep.subr.mxu0 0.0
        %625 = vmatpush1.msra.mxu0 0.0
        %626 = vmatprep.subr.mxu0 0.0
        %627 = vmatpush1.msra.mxu0 0.0
        %628 = vmatprep.subr.mxu0 0.0
        %v629 = vand.u32 %v316, 4294901760
        %630 = vmatpush1.msra.mxu0 %v629
        %631 = vmatprep.subr.mxu0 0.0
        %v632 = vand.u32 %v315, 4294901760
        %633 = vmatpush1.msra.mxu0 %v632
        %634 = vmatprep.subr.mxu0 0.0
        %v635 = vand.u32 %v314, 4294901760
        %636 = vmatpush1.msra.mxu0 %v635
        %637 = vmatprep.subr.mxu0 0.0
        %v638 = vand.u32 %v313, 4294901760
        %639 = vmatpush1.msra.mxu0 %v638
        %640 = vmatprep.subr.mxu0 0.0
        %641 = vmatpush2.msra.mxu0 0.0
        %642 = vmatprep.subr.mxu0 0.0
        %643 = vmatpush2.msra.mxu0 0.0
        %644 = vmatprep.subr.mxu0 0.0
        %645 = vmatpush2.msra.mxu0 0.0
        %646 = vmatprep.subr.mxu0 0.0
        %647 = vmatpush2.msra.mxu0 0.0
        %648 = vmatprep.subr.mxu0 0.0
        %649 = vmatpush2.msra.mxu0 0.0
        %650 = vmatprep.subr.mxu0 0.0
        %651 = vmatpush2.msra.mxu0 0.0
        %652 = vmatprep.subr.mxu0 0.0
        %653 = vmatpush2.msra.mxu0 0.0
        %654 = vmatprep.subr.mxu0 0.0
        %655 = vmatpush2.msra.mxu0 0.0
        %656 = vmatprep.subr.mxu0 0.0
        %657 = vmatpush2.msra.mxu0 0.0
        %658 = vmatprep.subr.mxu0 0.0
        %659 = vmatpush2.msra.mxu0 0.0
        %660 = vmatprep.subr.mxu0 0.0
        %661 = vmatpush2.msra.mxu0 0.0
        %662 = vmatprep.subr.mxu0 0.0
        %663 = vmatpush2.msra.mxu0 0.0
        %664 = vmatprep.subr.mxu0 0.0
        %665 = vmatpush2.msra.mxu0 0.0
        %666 = vmatprep.subr.mxu0 0.0
        %667 = vmatpush2.msra.mxu0 0.0
        %668 = vmatprep.subr.mxu0 0.0
        %669 = vmatpush2.msra.mxu0 0.0
        %670 = vmatprep.subr.mxu0 0.0
        %671 = vmatpush2.msra.mxu0 0.0
        %672 = vmatprep.mubr.f32.mxu0 0.0
        %v673 = vand.u32 %v326, 4294901760
        %v674 = vsub.f32 %v326, %v673
        %v675 = vand.u32 %v674, 4294901760
        %676 = vmatmul.mubr.f32.gmra.mxu0 %v675
        %v677 = vpop.f32.mrf.mxu0
        %v678 = vadd.f32 %v594, %v677
        %v679 = vpop.f32.mrf.mxu0
        %680 = vmatprep.mubr.f32.mxu0 0.0
        %v681 = vand.u32 %v329, 4294901760
        %v682 = vsub.f32 %v329, %v681
        %v683 = vand.u32 %v682, 4294901760
        %684 = vmatmul.mubr.f32.gmra.mxu0 %v683
        %v685 = vpop.f32.mrf.mxu0
        %v686 = vadd.f32 %v601, %v685
        %v687 = vpop.f32.mrf.mxu0
        %688 = vdwg.mxu0
        %689 = vmatprep.subr.mxu0 0.0
        %690 = vmatpush1.msra.mxu0 0.0
        %691 = vmatprep.subr.mxu0 0.0
        %692 = vmatpush1.msra.mxu0 0.0
        %693 = vmatprep.subr.mxu0 0.0
        %694 = vmatpush1.msra.mxu0 0.0
        %695 = vmatprep.subr.mxu0 0.0
        %696 = vmatpush1.msra.mxu0 0.0
        %697 = vmatprep.subr.mxu0 0.0
        %698 = vmatpush1.msra.mxu0 0.0
        %699 = vmatprep.subr.mxu0 0.0
        %700 = vmatpush1.msra.mxu0 0.0
        %701 = vmatprep.subr.mxu0 0.0
        %702 = vmatpush1.msra.mxu0 0.0
        %703 = vmatprep.subr.mxu0 0.0
        %704 = vmatpush1.msra.mxu0 0.0
        %705 = vmatprep.subr.mxu0 0.0
        %706 = vmatpush1.msra.mxu0 0.0
        %707 = vmatprep.subr.mxu0 0.0
        %708 = vmatpush1.msra.mxu0 0.0
        %709 = vmatprep.subr.mxu0 0.0
        %710 = vmatpush1.msra.mxu0 0.0
        %711 = vmatprep.subr.mxu0 0.0
        %712 = vmatpush1.msra.mxu0 0.0
        %713 = vmatprep.subr.mxu0 0.0
        %v714 = vand.u32 %v316, 4294901760
        %v715 = vsub.f32 %v316, %v714
        %v716 = vand.u32 %v715, 4294901760
        %717 = vmatpush1.msra.mxu0 %v716
        %718 = vmatprep.subr.mxu0 0.0
        %v719 = vand.u32 %v315, 4294901760
        %v720 = vsub.f32 %v315, %v719
        %v721 = vand.u32 %v720, 4294901760
        %722 = vmatpush1.msra.mxu0 %v721
        %723 = vmatprep.subr.mxu0 0.0
        %v724 = vand.u32 %v314, 4294901760
        %v725 = vsub.f32 %v314, %v724
        %v726 = vand.u32 %v725, 4294901760
        %727 = vmatpush1.msra.mxu0 %v726
        %728 = vmatprep.subr.mxu0 0.0
        %v729 = vand.u32 %v313, 4294901760
        %v730 = vsub.f32 %v313, %v729
        %v731 = vand.u32 %v730, 4294901760
        %732 = vmatpush1.msra.mxu0 %v731
        %733 = vmatprep.subr.mxu0 0.0
        %734 = vmatpush2.msra.mxu0 0.0
        %735 = vmatprep.subr.mxu0 0.0
        %736 = vmatpush2.msra.mxu0 0.0
        %737 = vmatprep.subr.mxu0 0.0
        %738 = vmatpush2.msra.mxu0 0.0
        %739 = vmatprep.subr.mxu0 0.0
        %740 = vmatpush2.msra.mxu0 0.0
        %741 = vmatprep.subr.mxu0 0.0
        %742 = vmatpush2.msra.mxu0 0.0
        %743 = vmatprep.subr.mxu0 0.0
        %744 = vmatpush2.msra.mxu0 0.0
        %745 = vmatprep.subr.mxu0 0.0
        %746 = vmatpush2.msra.mxu0 0.0
        %747 = vmatprep.subr.mxu0 0.0
        %748 = vmatpush2.msra.mxu0 0.0
        %749 = vmatprep.subr.mxu0 0.0
        %750 = vmatpush2.msra.mxu0 0.0
        %751 = vmatprep.subr.mxu0 0.0
        %752 = vmatpush2.msra.mxu0 0.0
        %753 = vmatprep.subr.mxu0 0.0
        %754 = vmatpush2.msra.mxu0 0.0
        %755 = vmatprep.subr.mxu0 0.0
        %756 = vmatpush2.msra.mxu0 0.0
        %757 = vmatprep.subr.mxu0 0.0
        %758 = vmatpush2.msra.mxu0 0.0
        %759 = vmatprep.subr.mxu0 0.0
        %760 = vmatpush2.msra.mxu0 0.0
        %761 = vmatprep.subr.mxu0 0.0
        %762 = vmatpush2.msra.mxu0 0.0
        %763 = vmatprep.subr.mxu0 0.0
        %764 = vmatpush2.msra.mxu0 0.0
        %765 = vmatprep.mubr.f32.mxu0 0.0
        %v766 = vand.u32 %v326, 4294901760
        %767 = vmatmul.mubr.f32.gmra.mxu0 %v766
        %v768 = vpop.f32.mrf.mxu0
        %v769 = vadd.f32 %v678, %v768
        %v770 = vpop.f32.mrf.mxu0
        %771 = vmatprep.mubr.f32.mxu0 0.0
        %v772 = vand.u32 %v329, 4294901760
        %773 = vmatmul.mubr.f32.gmra.mxu0 %v772
        %v774 = vpop.f32.mrf.mxu0
        %v775 = vadd.f32 %v686, %v774
        %v776 = vpop.f32.mrf.mxu0
        %777 = vdwg.mxu0
        %778 = vmatprep.subr.mxu0 0.0
        %779 = vmatpush1.msra.mxu0 0.0
        %780 = vmatprep.subr.mxu0 0.0
        %781 = vmatpush1.msra.mxu0 0.0
        %782 = vmatprep.subr.mxu0 0.0
        %783 = vmatpush1.msra.mxu0 0.0
        %784 = vmatprep.subr.mxu0 0.0
        %785 = vmatpush1.msra.mxu0 0.0
        %786 = vmatprep.subr.mxu0 0.0
        %787 = vmatpush1.msra.mxu0 0.0
        %788 = vmatprep.subr.mxu0 0.0
        %789 = vmatpush1.msra.mxu0 0.0
        %790 = vmatprep.subr.mxu0 0.0
        %791 = vmatpush1.msra.mxu0 0.0
        %792 = vmatprep.subr.mxu0 0.0
        %793 = vmatpush1.msra.mxu0 0.0
        %794 = vmatprep.subr.mxu0 0.0
        %795 = vmatpush1.msra.mxu0 0.0
        %796 = vmatprep.subr.mxu0 0.0
        %797 = vmatpush1.msra.mxu0 0.0
        %798 = vmatprep.subr.mxu0 0.0
        %799 = vmatpush1.msra.mxu0 0.0
        %800 = vmatprep.subr.mxu0 0.0
        %801 = vmatpush1.msra.mxu0 0.0
        %802 = vmatprep.subr.mxu0 0.0
        %v803 = vand.u32 %v316, 4294901760
        %804 = vmatpush1.msra.mxu0 %v803
        %805 = vmatprep.subr.mxu0 0.0
        %v806 = vand.u32 %v315, 4294901760
        %807 = vmatpush1.msra.mxu0 %v806
        %808 = vmatprep.subr.mxu0 0.0
        %v809 = vand.u32 %v314, 4294901760
        %810 = vmatpush1.msra.mxu0 %v809
        %811 = vmatprep.subr.mxu0 0.0
        %v812 = vand.u32 %v313, 4294901760
        %813 = vmatpush1.msra.mxu0 %v812
        %814 = vmatprep.subr.mxu0 0.0
        %815 = vmatpush2.msra.mxu0 0.0
        %816 = vmatprep.subr.mxu0 0.0
        %817 = vmatpush2.msra.mxu0 0.0
        %818 = vmatprep.subr.mxu0 0.0
        %819 = vmatpush2.msra.mxu0 0.0
        %820 = vmatprep.subr.mxu0 0.0
        %821 = vmatpush2.msra.mxu0 0.0
        %822 = vmatprep.subr.mxu0 0.0
        %823 = vmatpush2.msra.mxu0 0.0
        %824 = vmatprep.subr.mxu0 0.0
        %825 = vmatpush2.msra.mxu0 0.0
        %826 = vmatprep.subr.mxu0 0.0
        %827 = vmatpush2.msra.mxu0 0.0
        %828 = vmatprep.subr.mxu0 0.0
        %829 = vmatpush2.msra.mxu0 0.0
        %830 = vmatprep.subr.mxu0 0.0
        %831 = vmatpush2.msra.mxu0 0.0
        %832 = vmatprep.subr.mxu0 0.0
        %833 = vmatpush2.msra.mxu0 0.0
        %834 = vmatprep.subr.mxu0 0.0
        %835 = vmatpush2.msra.mxu0 0.0
        %836 = vmatprep.subr.mxu0 0.0
        %837 = vmatpush2.msra.mxu0 0.0
        %838 = vmatprep.subr.mxu0 0.0
        %839 = vmatpush2.msra.mxu0 0.0
        %840 = vmatprep.subr.mxu0 0.0
        %841 = vmatpush2.msra.mxu0 0.0
        %842 = vmatprep.subr.mxu0 0.0
        %843 = vmatpush2.msra.mxu0 0.0
        %844 = vmatprep.subr.mxu0 0.0
        %845 = vmatpush2.msra.mxu0 0.0
        %846 = vmatprep.mubr.f32.mxu0 0.0
        %v847 = vand.u32 %v326, 4294901760
        %848 = vmatmul.mubr.f32.gmra.mxu0 %v847
        %v849 = vpop.f32.mrf.mxu0
        %v850 = vadd.f32 %v769, %v849
        %v851 = vpop.f32.mrf.mxu0
        %852 = vmatprep.mubr.f32.mxu0 0.0
        %v853 = vand.u32 %v329, 4294901760
        %854 = vmatmul.mubr.f32.gmra.mxu0 %v853
        %v855 = vpop.f32.mrf.mxu0
        %v856 = vadd.f32 %v775, %v855
        %v857 = vpop.f32.mrf.mxu0
        %858 = vdwg.mxu0
        %v859 = vmul.f32 %v850, 3.0
        %v860 = vmul.f32 %v856, 3.0
        %v861 = vtanh.pop %v859
        %v862 = vtanh.pop %v860
        %v863 = vld [vmem:[#allocation3] sm:$0xff]
        %v864 = vld [vmem:[#allocation3 + $0x8] sm:$0xff]
        %v865 = vld [vmem:[%s294] sm:$0xff]
        %v866 = vld [vmem:[%s294 + $0x8] sm:$0xff]
        %v867 = vld [vmem:[%s294 + $0x10] sm:$0xff]
        %v868 = vld [vmem:[%s294 + $0x18] sm:$0xff]
        %v869 = vld [vmem:[%s297] sm:$0x1]
        %v871 = vlaneseq
        %v872 = vshrl.u32 %v871, 7
        %v873 = vsub.s32 0, %v872
        %v874 = vrot.slane %v869, %v873
        %v877 = vsel %vm324, %v863, 0
        %v880 = vsel %vm324, %v864, 0
        %882 = vmatprep.subr.mxu0 0.0
        %883 = vmatpush1.msra.mxu0 0.0
        %884 = vmatprep.subr.mxu0 0.0
        %885 = vmatpush1.msra.mxu0 0.0
        %886 = vmatprep.subr.mxu0 0.0
        %887 = vmatpush1.msra.mxu0 0.0
        %888 = vmatprep.subr.mxu0 0.0
        %889 = vmatpush1.msra.mxu0 0.0
        %890 = vmatprep.subr.mxu0 0.0
        %891 = vmatpush1.msra.mxu0 0.0
        %892 = vmatprep.subr.mxu0 0.0
        %893 = vmatpush1.msra.mxu0 0.0
        %894 = vmatprep.subr.mxu0 0.0
        %895 = vmatpush1.msra.mxu0 0.0
        %896 = vmatprep.subr.mxu0 0.0
        %897 = vmatpush1.msra.mxu0 0.0
        %898 = vmatprep.subr.mxu0 0.0
        %899 = vmatpush1.msra.mxu0 0.0
        %900 = vmatprep.subr.mxu0 0.0
        %901 = vmatpush1.msra.mxu0 0.0
        %902 = vmatprep.subr.mxu0 0.0
        %903 = vmatpush1.msra.mxu0 0.0
        %904 = vmatprep.subr.mxu0 0.0
        %905 = vmatpush1.msra.mxu0 0.0
        %906 = vmatprep.subr.mxu0 0.0
        %v907 = vand.u32 %v868, 4294901760
        %908 = vmatpush1.msra.mxu0 %v907
        %909 = vmatprep.subr.mxu0 0.0
        %v910 = vand.u32 %v867, 4294901760
        %911 = vmatpush1.msra.mxu0 %v910
        %912 = vmatprep.subr.mxu0 0.0
        %v913 = vand.u32 %v866, 4294901760
        %914 = vmatpush1.msra.mxu0 %v913
        %915 = vmatprep.subr.mxu0 0.0
        %v916 = vand.u32 %v865, 4294901760
        %917 = vmatpush1.msra.mxu0 %v916
        %918 = vmatprep.subr.mxu0 0.0
        %919 = vmatpush2.msra.mxu0 0.0
        %920 = vmatprep.subr.mxu0 0.0
        %921 = vmatpush2.msra.mxu0 0.0
        %922 = vmatprep.subr.mxu0 0.0
        %923 = vmatpush2.msra.mxu0 0.0
        %924 = vmatprep.subr.mxu0 0.0
        %925 = vmatpush2.msra.mxu0 0.0
        %926 = vmatprep.subr.mxu0 0.0
        %927 = vmatpush2.msra.mxu0 0.0
        %928 = vmatprep.subr.mxu0 0.0
        %929 = vmatpush2.msra.mxu0 0.0
        %930 = vmatprep.subr.mxu0 0.0
        %931 = vmatpush2.msra.mxu0 0.0
        %932 = vmatprep.subr.mxu0 0.0
        %933 = vmatpush2.msra.mxu0 0.0
        %934 = vmatprep.subr.mxu0 0.0
        %935 = vmatpush2.msra.mxu0 0.0
        %936 = vmatprep.subr.mxu0 0.0
        %937 = vmatpush2.msra.mxu0 0.0
        %938 = vmatprep.subr.mxu0 0.0
        %939 = vmatpush2.msra.mxu0 0.0
        %940 = vmatprep.subr.mxu0 0.0
        %941 = vmatpush2.msra.mxu0 0.0
        %942 = vmatprep.subr.mxu0 0.0
        %943 = vmatpush2.msra.mxu0 0.0
        %944 = vmatprep.subr.mxu0 0.0
        %945 = vmatpush2.msra.mxu0 0.0
        %946 = vmatprep.subr.mxu0 0.0
        %947 = vmatpush2.msra.mxu0 0.0
        %948 = vmatprep.subr.mxu0 0.0
        %949 = vmatpush2.msra.mxu0 0.0
        %950 = vmatprep.mubr.f32.mxu0 0.0
        %v951 = vand.u32 %v877, 4294901760
        %v952 = vsub.f32 %v877, %v951
        %v953 = vand.u32 %v952, 4294901760
        %v954 = vsub.f32 %v952, %v953
        %v955 = vand.u32 %v954, 4294901760
        %956 = vmatmul.mubr.f32.gmra.mxu0 %v955
        %v957 = vpop.f32.mrf.mxu0
        %v958 = vadd.f32 %v874, %v957
        %v959 = vpop.f32.mrf.mxu0
        %960 = vmatprep.mubr.f32.mxu0 0.0
        %v961 = vand.u32 %v880, 4294901760
        %v962 = vsub.f32 %v880, %v961
        %v963 = vand.u32 %v962, 4294901760
        %v964 = vsub.f32 %v962, %v963
        %v965 = vand.u32 %v964, 4294901760
        %966 = vmatmul.mubr.f32.gmra.mxu0 %v965
        %v967 = vpop.f32.mrf.mxu0
        %v968 = vadd.f32 %v874, %v967
        %v969 = vpop.f32.mrf.mxu0
        %970 = vdwg.mxu0
        %971 = vmatprep.subr.mxu0 0.0
        %972 = vmatpush1.msra.mxu0 0.0
        %973 = vmatprep.subr.mxu0 0.0
        %974 = vmatpush1.msra.mxu0 0.0
        %975 = vmatprep.subr.mxu0 0.0
        %976 = vmatpush1.msra.mxu0 0.0
        %977 = vmatprep.subr.mxu0 0.0
        %978 = vmatpush1.msra.mxu0 0.0
        %979 = vmatprep.subr.mxu0 0.0
        %980 = vmatpush1.msra.mxu0 0.0
        %981 = vmatprep.subr.mxu0 0.0
        %982 = vmatpush1.msra.mxu0 0.0
        %983 = vmatprep.subr.mxu0 0.0
        %984 = vmatpush1.msra.mxu0 0.0
        %985 = vmatprep.subr.mxu0 0.0
        %986 = vmatpush1.msra.mxu0 0.0
        %987 = vmatprep.subr.mxu0 0.0
        %988 = vmatpush1.msra.mxu0 0.0
        %989 = vmatprep.subr.mxu0 0.0
        %990 = vmatpush1.msra.mxu0 0.0
        %991 = vmatprep.subr.mxu0 0.0
        %992 = vmatpush1.msra.mxu0 0.0
        %993 = vmatprep.subr.mxu0 0.0
        %994 = vmatpush1.msra.mxu0 0.0
        %995 = vmatprep.subr.mxu0 0.0
        %v996 = vand.u32 %v868, 4294901760
        %v997 = vsub.f32 %v868, %v996
        %v998 = vand.u32 %v997, 4294901760
        %v999 = vsub.f32 %v997, %v998
        %v1000 = vand.u32 %v999, 4294901760
        %1001 = vmatpush1.msra.mxu0 %v1000
        %1002 = vmatprep.subr.mxu0 0.0
        %v1003 = vand.u32 %v867, 4294901760
        %v1004 = vsub.f32 %v867, %v1003
        %v1005 = vand.u32 %v1004, 4294901760
        %v1006 = vsub.f32 %v1004, %v1005
        %v1007 = vand.u32 %v1006, 4294901760
        %1008 = vmatpush1.msra.mxu0 %v1007
        %1009 = vmatprep.subr.mxu0 0.0
        %v1010 = vand.u32 %v866, 4294901760
        %v1011 = vsub.f32 %v866, %v1010
        %v1012 = vand.u32 %v1011, 4294901760
        %v1013 = vsub.f32 %v1011, %v1012
        %v1014 = vand.u32 %v1013, 4294901760
        %1015 = vmatpush1.msra.mxu0 %v1014
        %1016 = vmatprep.subr.mxu0 0.0
        %v1017 = vand.u32 %v865, 4294901760
        %v1018 = vsub.f32 %v865, %v1017
        %v1019 = vand.u32 %v1018, 4294901760
        %v1020 = vsub.f32 %v1018, %v1019
        %v1021 = vand.u32 %v1020, 4294901760
        %1022 = vmatpush1.msra.mxu0 %v1021
        %1023 = vmatprep.subr.mxu0 0.0
        %1024 = vmatpush2.msra.mxu0 0.0
        %1025 = vmatprep.subr.mxu0 0.0
        %1026 = vmatpush2.msra.mxu0 0.0
        %1027 = vmatprep.subr.mxu0 0.0
        %1028 = vmatpush2.msra.mxu0 0.0
        %1029 = vmatprep.subr.mxu0 0.0
        %1030 = vmatpush2.msra.mxu0 0.0
        %1031 = vmatprep.subr.mxu0 0.0
        %1032 = vmatpush2.msra.mxu0 0.0
        %1033 = vmatprep.subr.mxu0 0.0
        %1034 = vmatpush2.msra.mxu0 0.0
        %1035 = vmatprep.subr.mxu0 0.0
        %1036 = vmatpush2.msra.mxu0 0.0
        %1037 = vmatprep.subr.mxu0 0.0
        %1038 = vmatpush2.msra.mxu0 0.0
        %1039 = vmatprep.subr.mxu0 0.0
        %1040 = vmatpush2.msra.mxu0 0.0
        %1041 = vmatprep.subr.mxu0 0.0
        %1042 = vmatpush2.msra.mxu0 0.0
        %1043 = vmatprep.subr.mxu0 0.0
        %1044 = vmatpush2.msra.mxu0 0.0
        %1045 = vmatprep.subr.mxu0 0.0
        %1046 = vmatpush2.msra.mxu0 0.0
        %1047 = vmatprep.subr.mxu0 0.0
        %1048 = vmatpush2.msra.mxu0 0.0
        %1049 = vmatprep.subr.mxu0 0.0
        %1050 = vmatpush2.msra.mxu0 0.0
        %1051 = vmatprep.subr.mxu0 0.0
        %1052 = vmatpush2.msra.mxu0 0.0
        %1053 = vmatprep.subr.mxu0 0.0
        %1054 = vmatpush2.msra.mxu0 0.0
        %1055 = vmatprep.mubr.f32.mxu0 0.0
        %v1056 = vand.u32 %v877, 4294901760
        %1057 = vmatmul.mubr.f32.gmra.mxu0 %v1056
        %v1058 = vpop.f32.mrf.mxu0
        %v1059 = vadd.f32 %v958, %v1058
        %v1060 = vpop.f32.mrf.mxu0
        %1061 = vmatprep.mubr.f32.mxu0 0.0
        %v1062 = vand.u32 %v880, 4294901760
        %1063 = vmatmul.mubr.f32.gmra.mxu0 %v1062
        %v1064 = vpop.f32.mrf.mxu0
        %v1065 = vadd.f32 %v968, %v1064
        %v1066 = vpop.f32.mrf.mxu0
        %1067 = vdwg.mxu0
        %1068 = vmatprep.subr.mxu0 0.0
        %1069 = vmatpush1.msra.mxu0 0.0
        %1070 = vmatprep.subr.mxu0 0.0
        %1071 = vmatpush1.msra.mxu0 0.0
        %1072 = vmatprep.subr.mxu0 0.0
        %1073 = vmatpush1.msra.mxu0 0.0
        %1074 = vmatprep.subr.mxu0 0.0
        %1075 = vmatpush1.msra.mxu0 0.0
        %1076 = vmatprep.subr.mxu0 0.0
        %1077 = vmatpush1.msra.mxu0 0.0
        %1078 = vmatprep.subr.mxu0 0.0
        %1079 = vmatpush1.msra.mxu0 0.0
        %1080 = vmatprep.subr.mxu0 0.0
        %1081 = vmatpush1.msra.mxu0 0.0
        %1082 = vmatprep.subr.mxu0 0.0
        %1083 = vmatpush1.msra.mxu0 0.0
        %1084 = vmatprep.subr.mxu0 0.0
        %1085 = vmatpush1.msra.mxu0 0.0
        %1086 = vmatprep.subr.mxu0 0.0
        %1087 = vmatpush1.msra.mxu0 0.0
        %1088 = vmatprep.subr.mxu0 0.0
        %1089 = vmatpush1.msra.mxu0 0.0
        %1090 = vmatprep.subr.mxu0 0.0
        %1091 = vmatpush1.msra.mxu0 0.0
        %1092 = vmatprep.subr.mxu0 0.0
        %v1093 = vand.u32 %v868, 4294901760
        %v1094 = vsub.f32 %v868, %v1093
        %1095 = vmatpush1.msra.mxu0 %v1094
        %1096 = vmatprep.subr.mxu0 0.0
        %v1097 = vand.u32 %v867, 4294901760
        %v1098 = vsub.f32 %v867, %v1097
        %1099 = vmatpush1.msra.mxu0 %v1098
        %1100 = vmatprep.subr.mxu0 0.0
        %v1101 = vand.u32 %v866, 4294901760
        %v1102 = vsub.f32 %v866, %v1101
        %1103 = vmatpush1.msra.mxu0 %v1102
        %1104 = vmatprep.subr.mxu0 0.0
        %v1105 = vand.u32 %v865, 4294901760
        %v1106 = vsub.f32 %v865, %v1105
        %1107 = vmatpush1.msra.mxu0 %v1106
        %1108 = vmatprep.subr.mxu0 0.0
        %1109 = vmatpush2.msra.mxu0 0.0
        %1110 = vmatprep.subr.mxu0 0.0
        %1111 = vmatpush2.msra.mxu0 0.0
        %1112 = vmatprep.subr.mxu0 0.0
        %1113 = vmatpush2.msra.mxu0 0.0
        %1114 = vmatprep.subr.mxu0 0.0
        %1115 = vmatpush2.msra.mxu0 0.0
        %1116 = vmatprep.subr.mxu0 0.0
        %1117 = vmatpush2.msra.mxu0 0.0
        %1118 = vmatprep.subr.mxu0 0.0
        %1119 = vmatpush2.msra.mxu0 0.0
        %1120 = vmatprep.subr.mxu0 0.0
        %1121 = vmatpush2.msra.mxu0 0.0
        %1122 = vmatprep.subr.mxu0 0.0
        %1123 = vmatpush2.msra.mxu0 0.0
        %1124 = vmatprep.subr.mxu0 0.0
        %1125 = vmatpush2.msra.mxu0 0.0
        %1126 = vmatprep.subr.mxu0 0.0
        %1127 = vmatpush2.msra.mxu0 0.0
        %1128 = vmatprep.subr.mxu0 0.0
        %1129 = vmatpush2.msra.mxu0 0.0
        %1130 = vmatprep.subr.mxu0 0.0
        %1131 = vmatpush2.msra.mxu0 0.0
        %1132 = vmatprep.subr.mxu0 0.0
        %1133 = vmatpush2.msra.mxu0 0.0
        %1134 = vmatprep.subr.mxu0 0.0
        %1135 = vmatpush2.msra.mxu0 0.0
        %1136 = vmatprep.subr.mxu0 0.0
        %1137 = vmatpush2.msra.mxu0 0.0
        %1138 = vmatprep.subr.mxu0 0.0
        %1139 = vmatpush2.msra.mxu0 0.0
        %1140 = vmatprep.mubr.f32.mxu0 0.0
        %v1141 = vand.u32 %v877, 4294901760
        %v1142 = vsub.f32 %v877, %v1141
        %1143 = vmatmul.mubr.f32.gmra.mxu0 %v1142
        %v1144 = vpop.f32.mrf.mxu0
        %v1145 = vadd.f32 %v1059, %v1144
        %v1146 = vpop.f32.mrf.mxu0
        %1147 = vmatprep.mubr.f32.mxu0 0.0
        %v1148 = vand.u32 %v880, 4294901760
        %v1149 = vsub.f32 %v880, %v1148
        %1150 = vmatmul.mubr.f32.gmra.mxu0 %v1149
        %v1151 = vpop.f32.mrf.mxu0
        %v1152 = vadd.f32 %v1065, %v1151
        %v1153 = vpop.f32.mrf.mxu0
        %1154 = vdwg.mxu0
        %1155 = vmatprep.subr.mxu0 0.0
        %1156 = vmatpush1.msra.mxu0 0.0
        %1157 = vmatprep.subr.mxu0 0.0
        %1158 = vmatpush1.msra.mxu0 0.0
        %1159 = vmatprep.subr.mxu0 0.0
        %1160 = vmatpush1.msra.mxu0 0.0
        %1161 = vmatprep.subr.mxu0 0.0
        %1162 = vmatpush1.msra.mxu0 0.0
        %1163 = vmatprep.subr.mxu0 0.0
        %1164 = vmatpush1.msra.mxu0 0.0
        %1165 = vmatprep.subr.mxu0 0.0
        %1166 = vmatpush1.msra.mxu0 0.0
        %1167 = vmatprep.subr.mxu0 0.0
        %1168 = vmatpush1.msra.mxu0 0.0
        %1169 = vmatprep.subr.mxu0 0.0
        %1170 = vmatpush1.msra.mxu0 0.0
        %1171 = vmatprep.subr.mxu0 0.0
        %1172 = vmatpush1.msra.mxu0 0.0
        %1173 = vmatprep.subr.mxu0 0.0
        %1174 = vmatpush1.msra.mxu0 0.0
        %1175 = vmatprep.subr.mxu0 0.0
        %1176 = vmatpush1.msra.mxu0 0.0
        %1177 = vmatprep.subr.mxu0 0.0
        %1178 = vmatpush1.msra.mxu0 0.0
        %1179 = vmatprep.subr.mxu0 0.0
        %v1180 = vand.u32 %v868, 4294901760
        %1181 = vmatpush1.msra.mxu0 %v1180
        %1182 = vmatprep.subr.mxu0 0.0
        %v1183 = vand.u32 %v867, 4294901760
        %1184 = vmatpush1.msra.mxu0 %v1183
        %1185 = vmatprep.subr.mxu0 0.0
        %v1186 = vand.u32 %v866, 4294901760
        %1187 = vmatpush1.msra.mxu0 %v1186
        %1188 = vmatprep.subr.mxu0 0.0
        %v1189 = vand.u32 %v865, 4294901760
        %1190 = vmatpush1.msra.mxu0 %v1189
        %1191 = vmatprep.subr.mxu0 0.0
        %1192 = vmatpush2.msra.mxu0 0.0
        %1193 = vmatprep.subr.mxu0 0.0
        %1194 = vmatpush2.msra.mxu0 0.0
        %1195 = vmatprep.subr.mxu0 0.0
        %1196 = vmatpush2.msra.mxu0 0.0
        %1197 = vmatprep.subr.mxu0 0.0
        %1198 = vmatpush2.msra.mxu0 0.0
        %1199 = vmatprep.subr.mxu0 0.0
        %1200 = vmatpush2.msra.mxu0 0.0
        %1201 = vmatprep.subr.mxu0 0.0
        %1202 = vmatpush2.msra.mxu0 0.0
        %1203 = vmatprep.subr.mxu0 0.0
        %1204 = vmatpush2.msra.mxu0 0.0
        %1205 = vmatprep.subr.mxu0 0.0
        %1206 = vmatpush2.msra.mxu0 0.0
        %1207 = vmatprep.subr.mxu0 0.0
        %1208 = vmatpush2.msra.mxu0 0.0
        %1209 = vmatprep.subr.mxu0 0.0
        %1210 = vmatpush2.msra.mxu0 0.0
        %1211 = vmatprep.subr.mxu0 0.0
        %1212 = vmatpush2.msra.mxu0 0.0
        %1213 = vmatprep.subr.mxu0 0.0
        %1214 = vmatpush2.msra.mxu0 0.0
        %1215 = vmatprep.subr.mxu0 0.0
        %1216 = vmatpush2.msra.mxu0 0.0
        %1217 = vmatprep.subr.mxu0 0.0
        %1218 = vmatpush2.msra.mxu0 0.0
        %1219 = vmatprep.subr.mxu0 0.0
        %1220 = vmatpush2.msra.mxu0 0.0
        %1221 = vmatprep.subr.mxu0 0.0
        %1222 = vmatpush2.msra.mxu0 0.0
        %1223 = vmatprep.mubr.f32.mxu0 0.0
        %v1224 = vand.u32 %v877, 4294901760
        %v1225 = vsub.f32 %v877, %v1224
        %v1226 = vand.u32 %v1225, 4294901760
        %1227 = vmatmul.mubr.f32.gmra.mxu0 %v1226
        %v1228 = vpop.f32.mrf.mxu0
        %v1229 = vadd.f32 %v1145, %v1228
        %v1230 = vpop.f32.mrf.mxu0
        %1231 = vmatprep.mubr.f32.mxu0 0.0
        %v1232 = vand.u32 %v880, 4294901760
        %v1233 = vsub.f32 %v880, %v1232
        %v1234 = vand.u32 %v1233, 4294901760
        %1235 = vmatmul.mubr.f32.gmra.mxu0 %v1234
        %v1236 = vpop.f32.mrf.mxu0
        %v1237 = vadd.f32 %v1152, %v1236
        %v1238 = vpop.f32.mrf.mxu0
        %1239 = vdwg.mxu0
        %1240 = vmatprep.subr.mxu0 0.0
        %1241 = vmatpush1.msra.mxu0 0.0
        %1242 = vmatprep.subr.mxu0 0.0
        %1243 = vmatpush1.msra.mxu0 0.0
        %1244 = vmatprep.subr.mxu0 0.0
        %1245 = vmatpush1.msra.mxu0 0.0
        %1246 = vmatprep.subr.mxu0 0.0
        %1247 = vmatpush1.msra.mxu0 0.0
        %1248 = vmatprep.subr.mxu0 0.0
        %1249 = vmatpush1.msra.mxu0 0.0
        %1250 = vmatprep.subr.mxu0 0.0
        %1251 = vmatpush1.msra.mxu0 0.0
        %1252 = vmatprep.subr.mxu0 0.0
        %1253 = vmatpush1.msra.mxu0 0.0
        %1254 = vmatprep.subr.mxu0 0.0
        %1255 = vmatpush1.msra.mxu0 0.0
        %1256 = vmatprep.subr.mxu0 0.0
        %1257 = vmatpush1.msra.mxu0 0.0
        %1258 = vmatprep.subr.mxu0 0.0
        %1259 = vmatpush1.msra.mxu0 0.0
        %1260 = vmatprep.subr.mxu0 0.0
        %1261 = vmatpush1.msra.mxu0 0.0
        %1262 = vmatprep.subr.mxu0 0.0
        %1263 = vmatpush1.msra.mxu0 0.0
        %1264 = vmatprep.subr.mxu0 0.0
        %v1265 = vand.u32 %v868, 4294901760
        %v1266 = vsub.f32 %v868, %v1265
        %v1267 = vand.u32 %v1266, 4294901760
        %1268 = vmatpush1.msra.mxu0 %v1267
        %1269 = vmatprep.subr.mxu0 0.0
        %v1270 = vand.u32 %v867, 4294901760
        %v1271 = vsub.f32 %v867, %v1270
        %v1272 = vand.u32 %v1271, 4294901760
        %1273 = vmatpush1.msra.mxu0 %v1272
        %1274 = vmatprep.subr.mxu0 0.0
        %v1275 = vand.u32 %v866, 4294901760
        %v1276 = vsub.f32 %v866, %v1275
        %v1277 = vand.u32 %v1276, 4294901760
        %1278 = vmatpush1.msra.mxu0 %v1277
        %1279 = vmatprep.subr.mxu0 0.0
        %v1280 = vand.u32 %v865, 4294901760
        %v1281 = vsub.f32 %v865, %v1280
        %v1282 = vand.u32 %v1281, 4294901760
        %1283 = vmatpush1.msra.mxu0 %v1282
        %1284 = vmatprep.subr.mxu0 0.0
        %1285 = vmatpush2.msra.mxu0 0.0
        %1286 = vmatprep.subr.mxu0 0.0
        %1287 = vmatpush2.msra.mxu0 0.0
        %1288 = vmatprep.subr.mxu0 0.0
        %1289 = vmatpush2.msra.mxu0 0.0
        %1290 = vmatprep.subr.mxu0 0.0
        %1291 = vmatpush2.msra.mxu0 0.0
        %1292 = vmatprep.subr.mxu0 0.0
        %1293 = vmatpush2.msra.mxu0 0.0
        %1294 = vmatprep.subr.mxu0 0.0
        %1295 = vmatpush2.msra.mxu0 0.0
        %1296 = vmatprep.subr.mxu0 0.0
        %1297 = vmatpush2.msra.mxu0 0.0
        %1298 = vmatprep.subr.mxu0 0.0
        %1299 = vmatpush2.msra.mxu0 0.0
        %1300 = vmatprep.subr.mxu0 0.0
        %1301 = vmatpush2.msra.mxu0 0.0
        %1302 = vmatprep.subr.mxu0 0.0
        %1303 = vmatpush2.msra.mxu0 0.0
        %1304 = vmatprep.subr.mxu0 0.0
        %1305 = vmatpush2.msra.mxu0 0.0
        %1306 = vmatprep.subr.mxu0 0.0
        %1307 = vmatpush2.msra.mxu0 0.0
        %1308 = vmatprep.subr.mxu0 0.0
        %1309 = vmatpush2.msra.mxu0 0.0
        %1310 = vmatprep.subr.mxu0 0.0
        %1311 = vmatpush2.msra.mxu0 0.0
        %1312 = vmatprep.subr.mxu0 0.0
        %1313 = vmatpush2.msra.mxu0 0.0
        %1314 = vmatprep.subr.mxu0 0.0
        %1315 = vmatpush2.msra.mxu0 0.0
        %1316 = vmatprep.mubr.f32.mxu0 0.0
        %v1317 = vand.u32 %v877, 4294901760
        %1318 = vmatmul.mubr.f32.gmra.mxu0 %v1317
        %v1319 = vpop.f32.mrf.mxu0
        %v1320 = vadd.f32 %v1229, %v1319
        %v1321 = vpop.f32.mrf.mxu0
        %1322 = vmatprep.mubr.f32.mxu0 0.0
        %v1323 = vand.u32 %v880, 4294901760
        %1324 = vmatmul.mubr.f32.gmra.mxu0 %v1323
        %v1325 = vpop.f32.mrf.mxu0
        %v1326 = vadd.f32 %v1237, %v1325
        %v1327 = vpop.f32.mrf.mxu0
        %1328 = vdwg.mxu0
        %1329 = vmatprep.subr.mxu0 0.0
        %1330 = vmatpush1.msra.mxu0 0.0
        %1331 = vmatprep.subr.mxu0 0.0
        %1332 = vmatpush1.msra.mxu0 0.0
        %1333 = vmatprep.subr.mxu0 0.0
        %1334 = vmatpush1.msra.mxu0 0.0
        %1335 = vmatprep.subr.mxu0 0.0
        %1336 = vmatpush1.msra.mxu0 0.0
        %1337 = vmatprep.subr.mxu0 0.0
        %1338 = vmatpush1.msra.mxu0 0.0
        %1339 = vmatprep.subr.mxu0 0.0
        %1340 = vmatpush1.msra.mxu0 0.0
        %1341 = vmatprep.subr.mxu0 0.0
        %1342 = vmatpush1.msra.mxu0 0.0
        %1343 = vmatprep.subr.mxu0 0.0
        %1344 = vmatpush1.msra.mxu0 0.0
        %1345 = vmatprep.subr.mxu0 0.0
        %1346 = vmatpush1.msra.mxu0 0.0
        %1347 = vmatprep.subr.mxu0 0.0
        %1348 = vmatpush1.msra.mxu0 0.0
        %1349 = vmatprep.subr.mxu0 0.0
        %1350 = vmatpush1.msra.mxu0 0.0
        %1351 = vmatprep.subr.mxu0 0.0
        %1352 = vmatpush1.msra.mxu0 0.0
        %1353 = vmatprep.subr.mxu0 0.0
        %v1354 = vand.u32 %v868, 4294901760
        %1355 = vmatpush1.msra.mxu0 %v1354
        %1356 = vmatprep.subr.mxu0 0.0
        %v1357 = vand.u32 %v867, 4294901760
        %1358 = vmatpush1.msra.mxu0 %v1357
        %1359 = vmatprep.subr.mxu0 0.0
        %v1360 = vand.u32 %v866, 4294901760
        %1361 = vmatpush1.msra.mxu0 %v1360
        %1362 = vmatprep.subr.mxu0 0.0
        %v1363 = vand.u32 %v865, 4294901760
        %1364 = vmatpush1.msra.mxu0 %v1363
        %1365 = vmatprep.subr.mxu0 0.0
        %1366 = vmatpush2.msra.mxu0 0.0
        %1367 = vmatprep.subr.mxu0 0.0
        %1368 = vmatpush2.msra.mxu0 0.0
        %1369 = vmatprep.subr.mxu0 0.0
        %1370 = vmatpush2.msra.mxu0 0.0
        %1371 = vmatprep.subr.mxu0 0.0
        %1372 = vmatpush2.msra.mxu0 0.0
        %1373 = vmatprep.subr.mxu0 0.0
        %1374 = vmatpush2.msra.mxu0 0.0
        %1375 = vmatprep.subr.mxu0 0.0
        %1376 = vmatpush2.msra.mxu0 0.0
        %1377 = vmatprep.subr.mxu0 0.0
        %1378 = vmatpush2.msra.mxu0 0.0
        %1379 = vmatprep.subr.mxu0 0.0
        %1380 = vmatpush2.msra.mxu0 0.0
        %1381 = vmatprep.subr.mxu0 0.0
        %1382 = vmatpush2.msra.mxu0 0.0
        %1383 = vmatprep.subr.mxu0 0.0
        %1384 = vmatpush2.msra.mxu0 0.0
        %1385 = vmatprep.subr.mxu0 0.0
        %1386 = vmatpush2.msra.mxu0 0.0
        %1387 = vmatprep.subr.mxu0 0.0
        %1388 = vmatpush2.msra.mxu0 0.0
        %1389 = vmatprep.subr.mxu0 0.0
        %1390 = vmatpush2.msra.mxu0 0.0
        %1391 = vmatprep.subr.mxu0 0.0
        %1392 = vmatpush2.msra.mxu0 0.0
        %1393 = vmatprep.subr.mxu0 0.0
        %1394 = vmatpush2.msra.mxu0 0.0
        %1395 = vmatprep.subr.mxu0 0.0
        %1396 = vmatpush2.msra.mxu0 0.0
        %1397 = vmatprep.mubr.f32.mxu0 0.0
        %v1398 = vand.u32 %v877, 4294901760
        %1399 = vmatmul.mubr.f32.gmra.mxu0 %v1398
        %v1400 = vpop.f32.mrf.mxu0
        %v1401 = vadd.f32 %v1320, %v1400
        %v1402 = vpop.f32.mrf.mxu0
        %1403 = vmatprep.mubr.f32.mxu0 0.0
        %v1404 = vand.u32 %v880, 4294901760
        %1405 = vmatmul.mubr.f32.gmra.mxu0 %v1404
        %v1406 = vpop.f32.mrf.mxu0
        %v1407 = vadd.f32 %v1326, %v1406
        %v1408 = vpop.f32.mrf.mxu0
        %1409 = vdwg.mxu0
        %v1410 = vmul.f32 %v1401, 3.0
        %v1411 = vmul.f32 %v1407, 3.0
        %v1412 = vtanh.pop %v1410
        %v1413 = vtanh.pop %v1411
        %1414 = vst.msk [vmem:[#allocation2] sm:$0xff] %vm324, %v861
        %1415 = vst.msk [vmem:[#allocation2 + $0x8] sm:$0xff] %vm324, %v862
        %1416 = vst.msk [vmem:[#allocation3] sm:$0xff] %vm324, %v1412
        %1417 = vst.msk [vmem:[#allocation3 + $0x8] sm:$0xff] %vm324, %v1413
        %v1419 = vsel %vm324, %v861, 0
        %v1422 = vsel %vm324, %v862, 0
        %v1425 = vsel %vm324, %v1412, 0
        %v1428 = vsel %vm324, %v1413, 0
        %1430 = vmatprep.subr.mxu0 0.0
        %1431 = vmatpush1.xpose.msra.mxu0 0.0
        %1432 = vmatprep.subr.mxu0 0.0
        %1433 = vmatpush1.xpose.msra.mxu0 0.0
        %1434 = vmatprep.subr.mxu0 0.0
        %1435 = vmatpush1.xpose.msra.mxu0 0.0
        %1436 = vmatprep.subr.mxu0 0.0
        %1437 = vmatpush1.xpose.msra.mxu0 0.0
        %1438 = vmatprep.subr.mxu0 0.0
        %1439 = vmatpush1.xpose.msra.mxu0 0.0
        %1440 = vmatprep.subr.mxu0 0.0
        %1441 = vmatpush1.xpose.msra.mxu0 0.0
        %1442 = vmatprep.subr.mxu0 0.0
        %1443 = vmatpush1.xpose.msra.mxu0 0.0
        %1444 = vmatprep.subr.mxu0 0.0
        %1445 = vmatpush1.xpose.msra.mxu0 0.0
        %1446 = vmatprep.subr.mxu0 0.0
        %1447 = vmatpush1.xpose.msra.mxu0 0.0
        %1448 = vmatprep.subr.mxu0 0.0
        %1449 = vmatpush1.xpose.msra.mxu0 0.0
        %1450 = vmatprep.subr.mxu0 0.0
        %1451 = vmatpush1.xpose.msra.mxu0 0.0
        %1452 = vmatprep.subr.mxu0 0.0
        %1453 = vmatpush1.xpose.msra.mxu0 0.0
        %1454 = vmatprep.subr.mxu0 0.0
        %1455 = vmatpush1.xpose.msra.mxu0 0.0
        %1456 = vmatprep.subr.mxu0 0.0
        %1457 = vmatpush1.xpose.msra.mxu0 0.0
        %1458 = vmatprep.subr.mxu0 0.0
        %v1459 = vand.u32 %v1428, 4294901760
        %1460 = vmatpush1.xpose.msra.mxu0 %v1459
        %1461 = vmatprep.subr.mxu0 0.0
        %v1462 = vand.u32 %v1425, 4294901760
        %1463 = vmatpush1.xpose.msra.mxu0 %v1462
        %1464 = vmatprep.subr.mxu0 0.0
        %1465 = vmatpush2.xpose.msra.mxu0 0.0
        %1466 = vmatprep.subr.mxu0 0.0
        %1467 = vmatpush2.xpose.msra.mxu0 0.0
        %1468 = vmatprep.subr.mxu0 0.0
        %1469 = vmatpush2.xpose.msra.mxu0 0.0
        %1470 = vmatprep.subr.mxu0 0.0
        %1471 = vmatpush2.xpose.msra.mxu0 0.0
        %1472 = vmatprep.subr.mxu0 0.0
        %1473 = vmatpush2.xpose.msra.mxu0 0.0
        %1474 = vmatprep.subr.mxu0 0.0
        %1475 = vmatpush2.xpose.msra.mxu0 0.0
        %1476 = vmatprep.subr.mxu0 0.0
        %1477 = vmatpush2.xpose.msra.mxu0 0.0
        %1478 = vmatprep.subr.mxu0 0.0
        %1479 = vmatpush2.xpose.msra.mxu0 0.0
        %1480 = vmatprep.subr.mxu0 0.0
        %1481 = vmatpush2.xpose.msra.mxu0 0.0
        %1482 = vmatprep.subr.mxu0 0.0
        %1483 = vmatpush2.xpose.msra.mxu0 0.0
        %1484 = vmatprep.subr.mxu0 0.0
        %1485 = vmatpush2.xpose.msra.mxu0 0.0
        %1486 = vmatprep.subr.mxu0 0.0
        %1487 = vmatpush2.xpose.msra.mxu0 0.0
        %1488 = vmatprep.subr.mxu0 0.0
        %1489 = vmatpush2.xpose.msra.mxu0 0.0
        %1490 = vmatprep.subr.mxu0 0.0
        %1491 = vmatpush2.xpose.msra.mxu0 0.0
        %1492 = vmatprep.subr.mxu0 0.0
        %1493 = vmatpush2.xpose.msra.mxu0 0.0
        %1494 = vmatprep.subr.mxu0 0.0
        %1495 = vmatpush2.xpose.msra.mxu0 0.0
        %1496 = vmatprep.mubr.f32.mxu0 0.0
        %v1497 = vand.u32 %v1419, 4294901760
        %v1498 = vsub.f32 %v1419, %v1497
        %v1499 = vand.u32 %v1498, 4294901760
        %v1500 = vsub.f32 %v1498, %v1499
        %v1501 = vand.u32 %v1500, 4294901760
        %1502 = vmatmul.mubr.f32.gmra.mxu0 %v1501
        %v1503 = vpop.f32.mrf.mxu0
        %v1504 = vadd.f32 0.0, %v1503
        %v1505 = vpop.f32.mrf.mxu0
        %1506 = vmatprep.mubr.f32.mxu0 0.0
        %v1507 = vand.u32 %v1422, 4294901760
        %v1508 = vsub.f32 %v1422, %v1507
        %v1509 = vand.u32 %v1508, 4294901760
        %v1510 = vsub.f32 %v1508, %v1509
        %v1511 = vand.u32 %v1510, 4294901760
        %1512 = vmatmul.mubr.f32.gmra.mxu0 %v1511
        %v1513 = vpop.f32.mrf.mxu0
        %v1514 = vadd.f32 0.0, %v1513
        %v1515 = vpop.f32.mrf.mxu0
        %1516 = vdwg.mxu0
        %1517 = vmatprep.subr.mxu0 0.0
        %1518 = vmatpush1.xpose.msra.mxu0 0.0
        %1519 = vmatprep.subr.mxu0 0.0
        %1520 = vmatpush1.xpose.msra.mxu0 0.0
        %1521 = vmatprep.subr.mxu0 0.0
        %1522 = vmatpush1.xpose.msra.mxu0 0.0
        %1523 = vmatprep.subr.mxu0 0.0
        %1524 = vmatpush1.xpose.msra.mxu0 0.0
        %1525 = vmatprep.subr.mxu0 0.0
        %1526 = vmatpush1.xpose.msra.mxu0 0.0
        %1527 = vmatprep.subr.mxu0 0.0
        %1528 = vmatpush1.xpose.msra.mxu0 0.0
        %1529 = vmatprep.subr.mxu0 0.0
        %1530 = vmatpush1.xpose.msra.mxu0 0.0
        %1531 = vmatprep.subr.mxu0 0.0
        %1532 = vmatpush1.xpose.msra.mxu0 0.0
        %1533 = vmatprep.subr.mxu0 0.0
        %1534 = vmatpush1.xpose.msra.mxu0 0.0
        %1535 = vmatprep.subr.mxu0 0.0
        %1536 = vmatpush1.xpose.msra.mxu0 0.0
        %1537 = vmatprep.subr.mxu0 0.0
        %1538 = vmatpush1.xpose.msra.mxu0 0.0
        %1539 = vmatprep.subr.mxu0 0.0
        %1540 = vmatpush1.xpose.msra.mxu0 0.0
        %1541 = vmatprep.subr.mxu0 0.0
        %1542 = vmatpush1.xpose.msra.mxu0 0.0
        %1543 = vmatprep.subr.mxu0 0.0
        %1544 = vmatpush1.xpose.msra.mxu0 0.0
        %1545 = vmatprep.subr.mxu0 0.0
        %v1546 = vand.u32 %v1428, 4294901760
        %v1547 = vsub.f32 %v1428, %v1546
        %v1548 = vand.u32 %v1547, 4294901760
        %v1549 = vsub.f32 %v1547, %v1548
        %v1550 = vand.u32 %v1549, 4294901760
        %1551 = vmatpush1.xpose.msra.mxu0 %v1550
        %1552 = vmatprep.subr.mxu0 0.0
        %v1553 = vand.u32 %v1425, 4294901760
        %v1554 = vsub.f32 %v1425, %v1553
        %v1555 = vand.u32 %v1554, 4294901760
        %v1556 = vsub.f32 %v1554, %v1555
        %v1557 = vand.u32 %v1556, 4294901760
        %1558 = vmatpush1.xpose.msra.mxu0 %v1557
        %1559 = vmatprep.subr.mxu0 0.0
        %1560 = vmatpush2.xpose.msra.mxu0 0.0
        %1561 = vmatprep.subr.mxu0 0.0
        %1562 = vmatpush2.xpose.msra.mxu0 0.0
        %1563 = vmatprep.subr.mxu0 0.0
        %1564 = vmatpush2.xpose.msra.mxu0 0.0
        %1565 = vmatprep.subr.mxu0 0.0
        %1566 = vmatpush2.xpose.msra.mxu0 0.0
        %1567 = vmatprep.subr.mxu0 0.0
        %1568 = vmatpush2.xpose.msra.mxu0 0.0
        %1569 = vmatprep.subr.mxu0 0.0
        %1570 = vmatpush2.xpose.msra.mxu0 0.0
        %1571 = vmatprep.subr.mxu0 0.0
        %1572 = vmatpush2.xpose.msra.mxu0 0.0
        %1573 = vmatprep.subr.mxu0 0.0
        %1574 = vmatpush2.xpose.msra.mxu0 0.0
        %1575 = vmatprep.subr.mxu0 0.0
        %1576 = vmatpush2.xpose.msra.mxu0 0.0
        %1577 = vmatprep.subr.mxu0 0.0
        %1578 = vmatpush2.xpose.msra.mxu0 0.0
        %1579 = vmatprep.subr.mxu0 0.0
        %1580 = vmatpush2.xpose.msra.mxu0 0.0
        %1581 = vmatprep.subr.mxu0 0.0
        %1582 = vmatpush2.xpose.msra.mxu0 0.0
        %1583 = vmatprep.subr.mxu0 0.0
        %1584 = vmatpush2.xpose.msra.mxu0 0.0
        %1585 = vmatprep.subr.mxu0 0.0
        %1586 = vmatpush2.xpose.msra.mxu0 0.0
        %1587 = vmatprep.subr.mxu0 0.0
        %1588 = vmatpush2.xpose.msra.mxu0 0.0
        %1589 = vmatprep.subr.mxu0 0.0
        %1590 = vmatpush2.xpose.msra.mxu0 0.0
        %1591 = vmatprep.mubr.f32.mxu0 0.0
        %v1592 = vand.u32 %v1419, 4294901760
        %1593 = vmatmul.mubr.f32.gmra.mxu0 %v1592
        %v1594 = vpop.f32.mrf.mxu0
        %v1595 = vadd.f32 %v1504, %v1594
        %v1596 = vpop.f32.mrf.mxu0
        %1597 = vmatprep.mubr.f32.mxu0 0.0
        %v1598 = vand.u32 %v1422, 4294901760
        %1599 = vmatmul.mubr.f32.gmra.mxu0 %v1598
        %v1600 = vpop.f32.mrf.mxu0
        %v1601 = vadd.f32 %v1514, %v1600
        %v1602 = vpop.f32.mrf.mxu0
        %1603 = vdwg.mxu0
        %1604 = vmatprep.subr.mxu0 0.0
        %1605 = vmatpush1.xpose.msra.mxu0 0.0
        %1606 = vmatprep.subr.mxu0 0.0
        %1607 = vmatpush1.xpose.msra.mxu0 0.0
        %1608 = vmatprep.subr.mxu0 0.0
        %1609 = vmatpush1.xpose.msra.mxu0 0.0
        %1610 = vmatprep.subr.mxu0 0.0
        %1611 = vmatpush1.xpose.msra.mxu0 0.0
        %1612 = vmatprep.subr.mxu0 0.0
        %1613 = vmatpush1.xpose.msra.mxu0 0.0
        %1614 = vmatprep.subr.mxu0 0.0
        %1615 = vmatpush1.xpose.msra.mxu0 0.0
        %1616 = vmatprep.subr.mxu0 0.0
        %1617 = vmatpush1.xpose.msra.mxu0 0.0
        %1618 = vmatprep.subr.mxu0 0.0
        %1619 = vmatpush1.xpose.msra.mxu0 0.0
        %1620 = vmatprep.subr.mxu0 0.0
        %1621 = vmatpush1.xpose.msra.mxu0 0.0
        %1622 = vmatprep.subr.mxu0 0.0
        %1623 = vmatpush1.xpose.msra.mxu0 0.0
        %1624 = vmatprep.subr.mxu0 0.0
        %1625 = vmatpush1.xpose.msra.mxu0 0.0
        %1626 = vmatprep.subr.mxu0 0.0
        %1627 = vmatpush1.xpose.msra.mxu0 0.0
        %1628 = vmatprep.subr.mxu0 0.0
        %1629 = vmatpush1.xpose.msra.mxu0 0.0
        %1630 = vmatprep.subr.mxu0 0.0
        %1631 = vmatpush1.xpose.msra.mxu0 0.0
        %1632 = vmatprep.subr.mxu0 0.0
        %v1633 = vand.u32 %v1428, 4294901760
        %v1634 = vsub.f32 %v1428, %v1633
        %1635 = vmatpush1.xpose.msra.mxu0 %v1634
        %1636 = vmatprep.subr.mxu0 0.0
        %v1637 = vand.u32 %v1425, 4294901760
        %v1638 = vsub.f32 %v1425, %v1637
        %1639 = vmatpush1.xpose.msra.mxu0 %v1638
        %1640 = vmatprep.subr.mxu0 0.0
        %1641 = vmatpush2.xpose.msra.mxu0 0.0
        %1642 = vmatprep.subr.mxu0 0.0
        %1643 = vmatpush2.xpose.msra.mxu0 0.0
        %1644 = vmatprep.subr.mxu0 0.0
        %1645 = vmatpush2.xpose.msra.mxu0 0.0
        %1646 = vmatprep.subr.mxu0 0.0
        %1647 = vmatpush2.xpose.msra.mxu0 0.0
        %1648 = vmatprep.subr.mxu0 0.0
        %1649 = vmatpush2.xpose.msra.mxu0 0.0
        %1650 = vmatprep.subr.mxu0 0.0
        %1651 = vmatpush2.xpose.msra.mxu0 0.0
        %1652 = vmatprep.subr.mxu0 0.0
        %1653 = vmatpush2.xpose.msra.mxu0 0.0
        %1654 = vmatprep.subr.mxu0 0.0
        %1655 = vmatpush2.xpose.msra.mxu0 0.0
        %1656 = vmatprep.subr.mxu0 0.0
        %1657 = vmatpush2.xpose.msra.mxu0 0.0
        %1658 = vmatprep.subr.mxu0 0.0
        %1659 = vmatpush2.xpose.msra.mxu0 0.0
        %1660 = vmatprep.subr.mxu0 0.0
        %1661 = vmatpush2.xpose.msra.mxu0 0.0
        %1662 = vmatprep.subr.mxu0 0.0
        %1663 = vmatpush2.xpose.msra.mxu0 0.0
        %1664 = vmatprep.subr.mxu0 0.0
        %1665 = vmatpush2.xpose.msra.mxu0 0.0
        %1666 = vmatprep.subr.mxu0 0.0
        %1667 = vmatpush2.xpose.msra.mxu0 0.0
        %1668 = vmatprep.subr.mxu0 0.0
        %1669 = vmatpush2.xpose.msra.mxu0 0.0
        %1670 = vmatprep.subr.mxu0 0.0
        %1671 = vmatpush2.xpose.msra.mxu0 0.0
        %1672 = vmatprep.mubr.f32.mxu0 0.0
        %v1673 = vand.u32 %v1419, 4294901760
        %v1674 = vsub.f32 %v1419, %v1673
        %1675 = vmatmul.mubr.f32.gmra.mxu0 %v1674
        %v1676 = vpop.f32.mrf.mxu0
        %v1677 = vadd.f32 %v1595, %v1676
        %v1678 = vpop.f32.mrf.mxu0
        %1679 = vmatprep.mubr.f32.mxu0 0.0
        %v1680 = vand.u32 %v1422, 4294901760
        %v1681 = vsub.f32 %v1422, %v1680
        %1682 = vmatmul.mubr.f32.gmra.mxu0 %v1681
        %v1683 = vpop.f32.mrf.mxu0
        %v1684 = vadd.f32 %v1601, %v1683
        %v1685 = vpop.f32.mrf.mxu0
        %1686 = vdwg.mxu0
        %1687 = vmatprep.subr.mxu0 0.0
        %1688 = vmatpush1.xpose.msra.mxu0 0.0
        %1689 = vmatprep.subr.mxu0 0.0
        %1690 = vmatpush1.xpose.msra.mxu0 0.0
        %1691 = vmatprep.subr.mxu0 0.0
        %1692 = vmatpush1.xpose.msra.mxu0 0.0
        %1693 = vmatprep.subr.mxu0 0.0
        %1694 = vmatpush1.xpose.msra.mxu0 0.0
        %1695 = vmatprep.subr.mxu0 0.0
        %1696 = vmatpush1.xpose.msra.mxu0 0.0
        %1697 = vmatprep.subr.mxu0 0.0
        %1698 = vmatpush1.xpose.msra.mxu0 0.0
        %1699 = vmatprep.subr.mxu0 0.0
        %1700 = vmatpush1.xpose.msra.mxu0 0.0
        %1701 = vmatprep.subr.mxu0 0.0
        %1702 = vmatpush1.xpose.msra.mxu0 0.0
        %1703 = vmatprep.subr.mxu0 0.0
        %1704 = vmatpush1.xpose.msra.mxu0 0.0
        %1705 = vmatprep.subr.mxu0 0.0
        %1706 = vmatpush1.xpose.msra.mxu0 0.0
        %1707 = vmatprep.subr.mxu0 0.0
        %1708 = vmatpush1.xpose.msra.mxu0 0.0
        %1709 = vmatprep.subr.mxu0 0.0
        %1710 = vmatpush1.xpose.msra.mxu0 0.0
        %1711 = vmatprep.subr.mxu0 0.0
        %1712 = vmatpush1.xpose.msra.mxu0 0.0
        %1713 = vmatprep.subr.mxu0 0.0
        %1714 = vmatpush1.xpose.msra.mxu0 0.0
        %1715 = vmatprep.subr.mxu0 0.0
        %v1716 = vand.u32 %v1428, 4294901760
        %1717 = vmatpush1.xpose.msra.mxu0 %v1716
        %1718 = vmatprep.subr.mxu0 0.0
        %v1719 = vand.u32 %v1425, 4294901760
        %1720 = vmatpush1.xpose.msra.mxu0 %v1719
        %1721 = vmatprep.subr.mxu0 0.0
        %1722 = vmatpush2.xpose.msra.mxu0 0.0
        %1723 = vmatprep.subr.mxu0 0.0
        %1724 = vmatpush2.xpose.msra.mxu0 0.0
        %1725 = vmatprep.subr.mxu0 0.0
        %1726 = vmatpush2.xpose.msra.mxu0 0.0
        %1727 = vmatprep.subr.mxu0 0.0
        %1728 = vmatpush2.xpose.msra.mxu0 0.0
        %1729 = vmatprep.subr.mxu0 0.0
        %1730 = vmatpush2.xpose.msra.mxu0 0.0
        %1731 = vmatprep.subr.mxu0 0.0
        %1732 = vmatpush2.xpose.msra.mxu0 0.0
        %1733 = vmatprep.subr.mxu0 0.0
        %1734 = vmatpush2.xpose.msra.mxu0 0.0
        %1735 = vmatprep.subr.mxu0 0.0
        %1736 = vmatpush2.xpose.msra.mxu0 0.0
        %1737 = vmatprep.subr.mxu0 0.0
        %1738 = vmatpush2.xpose.msra.mxu0 0.0
        %1739 = vmatprep.subr.mxu0 0.0
        %1740 = vmatpush2.xpose.msra.mxu0 0.0
        %1741 = vmatprep.subr.mxu0 0.0
        %1742 = vmatpush2.xpose.msra.mxu0 0.0
        %1743 = vmatprep.subr.mxu0 0.0
        %1744 = vmatpush2.xpose.msra.mxu0 0.0
        %1745 = vmatprep.subr.mxu0 0.0
        %1746 = vmatpush2.xpose.msra.mxu0 0.0
        %1747 = vmatprep.subr.mxu0 0.0
        %1748 = vmatpush2.xpose.msra.mxu0 0.0
        %1749 = vmatprep.subr.mxu0 0.0
        %1750 = vmatpush2.xpose.msra.mxu0 0.0
        %1751 = vmatprep.subr.mxu0 0.0
        %1752 = vmatpush2.xpose.msra.mxu0 0.0
        %1753 = vmatprep.mubr.f32.mxu0 0.0
        %v1754 = vand.u32 %v1419, 4294901760
        %v1755 = vsub.f32 %v1419, %v1754
        %v1756 = vand.u32 %v1755, 4294901760
        %1757 = vmatmul.mubr.f32.gmra.mxu0 %v1756
        %v1758 = vpop.f32.mrf.mxu0
        %v1759 = vadd.f32 %v1677, %v1758
        %v1760 = vpop.f32.mrf.mxu0
        %1761 = vmatprep.mubr.f32.mxu0 0.0
        %v1762 = vand.u32 %v1422, 4294901760
        %v1763 = vsub.f32 %v1422, %v1762
        %v1764 = vand.u32 %v1763, 4294901760
        %1765 = vmatmul.mubr.f32.gmra.mxu0 %v1764
        %v1766 = vpop.f32.mrf.mxu0
        %v1767 = vadd.f32 %v1684, %v1766
        %v1768 = vpop.f32.mrf.mxu0
        %1769 = vdwg.mxu0
        %1770 = vmatprep.subr.mxu0 0.0
        %1771 = vmatpush1.xpose.msra.mxu0 0.0
        %1772 = vmatprep.subr.mxu0 0.0
        %1773 = vmatpush1.xpose.msra.mxu0 0.0
        %1774 = vmatprep.subr.mxu0 0.0
        %1775 = vmatpush1.xpose.msra.mxu0 0.0
        %1776 = vmatprep.subr.mxu0 0.0
        %1777 = vmatpush1.xpose.msra.mxu0 0.0
        %1778 = vmatprep.subr.mxu0 0.0
        %1779 = vmatpush1.xpose.msra.mxu0 0.0
        %1780 = vmatprep.subr.mxu0 0.0
        %1781 = vmatpush1.xpose.msra.mxu0 0.0
        %1782 = vmatprep.subr.mxu0 0.0
        %1783 = vmatpush1.xpose.msra.mxu0 0.0
        %1784 = vmatprep.subr.mxu0 0.0
        %1785 = vmatpush1.xpose.msra.mxu0 0.0
        %1786 = vmatprep.subr.mxu0 0.0
        %1787 = vmatpush1.xpose.msra.mxu0 0.0
        %1788 = vmatprep.subr.mxu0 0.0
        %1789 = vmatpush1.xpose.msra.mxu0 0.0
        %1790 = vmatprep.subr.mxu0 0.0
        %1791 = vmatpush1.xpose.msra.mxu0 0.0
        %1792 = vmatprep.subr.mxu0 0.0
        %1793 = vmatpush1.xpose.msra.mxu0 0.0
        %1794 = vmatprep.subr.mxu0 0.0
        %1795 = vmatpush1.xpose.msra.mxu0 0.0
        %1796 = vmatprep.subr.mxu0 0.0
        %1797 = vmatpush1.xpose.msra.mxu0 0.0
        %1798 = vmatprep.subr.mxu0 0.0
        %v1799 = vand.u32 %v1428, 4294901760
        %v1800 = vsub.f32 %v1428, %v1799
        %v1801 = vand.u32 %v1800, 4294901760
        %1802 = vmatpush1.xpose.msra.mxu0 %v1801
        %1803 = vmatprep.subr.mxu0 0.0
        %v1804 = vand.u32 %v1425, 4294901760
        %v1805 = vsub.f32 %v1425, %v1804
        %v1806 = vand.u32 %v1805, 4294901760
        %1807 = vmatpush1.xpose.msra.mxu0 %v1806
        %1808 = vmatprep.subr.mxu0 0.0
        %1809 = vmatpush2.xpose.msra.mxu0 0.0
        %1810 = vmatprep.subr.mxu0 0.0
        %1811 = vmatpush2.xpose.msra.mxu0 0.0
        %1812 = vmatprep.subr.mxu0 0.0
        %1813 = vmatpush2.xpose.msra.mxu0 0.0
        %1814 = vmatprep.subr.mxu0 0.0
        %1815 = vmatpush2.xpose.msra.mxu0 0.0
        %1816 = vmatprep.subr.mxu0 0.0
        %1817 = vmatpush2.xpose.msra.mxu0 0.0
        %1818 = vmatprep.subr.mxu0 0.0
        %1819 = vmatpush2.xpose.msra.mxu0 0.0
        %1820 = vmatprep.subr.mxu0 0.0
        %1821 = vmatpush2.xpose.msra.mxu0 0.0
        %1822 = vmatprep.subr.mxu0 0.0
        %1823 = vmatpush2.xpose.msra.mxu0 0.0
        %1824 = vmatprep.subr.mxu0 0.0
        %1825 = vmatpush2.xpose.msra.mxu0 0.0
        %1826 = vmatprep.subr.mxu0 0.0
        %1827 = vmatpush2.xpose.msra.mxu0 0.0
        %1828 = vmatprep.subr.mxu0 0.0
        %1829 = vmatpush2.xpose.msra.mxu0 0.0
        %1830 = vmatprep.subr.mxu0 0.0
        %1831 = vmatpush2.xpose.msra.mxu0 0.0
        %1832 = vmatprep.subr.mxu0 0.0
        %1833 = vmatpush2.xpose.msra.mxu0 0.0
        %1834 = vmatprep.subr.mxu0 0.0
        %1835 = vmatpush2.xpose.msra.mxu0 0.0
        %1836 = vmatprep.subr.mxu0 0.0
        %1837 = vmatpush2.xpose.msra.mxu0 0.0
        %1838 = vmatprep.subr.mxu0 0.0
        %1839 = vmatpush2.xpose.msra.mxu0 0.0
        %1840 = vmatprep.mubr.f32.mxu0 0.0
        %v1841 = vand.u32 %v1419, 4294901760
        %1842 = vmatmul.mubr.f32.gmra.mxu0 %v1841
        %v1843 = vpop.f32.mrf.mxu0
        %v1844 = vadd.f32 %v1759, %v1843
        %v1845 = vpop.f32.mrf.mxu0
        %1846 = vmatprep.mubr.f32.mxu0 0.0
        %v1847 = vand.u32 %v1422, 4294901760
        %1848 = vmatmul.mubr.f32.gmra.mxu0 %v1847
        %v1849 = vpop.f32.mrf.mxu0
        %v1850 = vadd.f32 %v1767, %v1849
        %v1851 = vpop.f32.mrf.mxu0
        %1852 = vdwg.mxu0
        %1853 = vmatprep.subr.mxu0 0.0
        %1854 = vmatpush1.xpose.msra.mxu0 0.0
        %1855 = vmatprep.subr.mxu0 0.0
        %1856 = vmatpush1.xpose.msra.mxu0 0.0
        %1857 = vmatprep.subr.mxu0 0.0
        %1858 = vmatpush1.xpose.msra.mxu0 0.0
        %1859 = vmatprep.subr.mxu0 0.0
        %1860 = vmatpush1.xpose.msra.mxu0 0.0
        %1861 = vmatprep.subr.mxu0 0.0
        %1862 = vmatpush1.xpose.msra.mxu0 0.0
        %1863 = vmatprep.subr.mxu0 0.0
        %1864 = vmatpush1.xpose.msra.mxu0 0.0
        %1865 = vmatprep.subr.mxu0 0.0
        %1866 = vmatpush1.xpose.msra.mxu0 0.0
        %1867 = vmatprep.subr.mxu0 0.0
        %1868 = vmatpush1.xpose.msra.mxu0 0.0
        %1869 = vmatprep.subr.mxu0 0.0
        %1870 = vmatpush1.xpose.msra.mxu0 0.0
        %1871 = vmatprep.subr.mxu0 0.0
        %1872 = vmatpush1.xpose.msra.mxu0 0.0
        %1873 = vmatprep.subr.mxu0 0.0
        %1874 = vmatpush1.xpose.msra.mxu0 0.0
        %1875 = vmatprep.subr.mxu0 0.0
        %1876 = vmatpush1.xpose.msra.mxu0 0.0
        %1877 = vmatprep.subr.mxu0 0.0
        %1878 = vmatpush1.xpose.msra.mxu0 0.0
        %1879 = vmatprep.subr.mxu0 0.0
        %1880 = vmatpush1.xpose.msra.mxu0 0.0
        %1881 = vmatprep.subr.mxu0 0.0
        %v1882 = vand.u32 %v1428, 4294901760
        %1883 = vmatpush1.xpose.msra.mxu0 %v1882
        %1884 = vmatprep.subr.mxu0 0.0
        %v1885 = vand.u32 %v1425, 4294901760
        %1886 = vmatpush1.xpose.msra.mxu0 %v1885
        %1887 = vmatprep.subr.mxu0 0.0
        %1888 = vmatpush2.xpose.msra.mxu0 0.0
        %1889 = vmatprep.subr.mxu0 0.0
        %1890 = vmatpush2.xpose.msra.mxu0 0.0
        %1891 = vmatprep.subr.mxu0 0.0
        %1892 = vmatpush2.xpose.msra.mxu0 0.0
        %1893 = vmatprep.subr.mxu0 0.0
        %1894 = vmatpush2.xpose.msra.mxu0 0.0
        %1895 = vmatprep.subr.mxu0 0.0
        %1896 = vmatpush2.xpose.msra.mxu0 0.0
        %1897 = vmatprep.subr.mxu0 0.0
        %1898 = vmatpush2.xpose.msra.mxu0 0.0
        %1899 = vmatprep.subr.mxu0 0.0
        %1900 = vmatpush2.xpose.msra.mxu0 0.0
        %1901 = vmatprep.subr.mxu0 0.0
        %1902 = vmatpush2.xpose.msra.mxu0 0.0
        %1903 = vmatprep.subr.mxu0 0.0
        %1904 = vmatpush2.xpose.msra.mxu0 0.0
        %1905 = vmatprep.subr.mxu0 0.0
        %1906 = vmatpush2.xpose.msra.mxu0 0.0
        %1907 = vmatprep.subr.mxu0 0.0
        %1908 = vmatpush2.xpose.msra.mxu0 0.0
        %1909 = vmatprep.subr.mxu0 0.0
        %1910 = vmatpush2.xpose.msra.mxu0 0.0
        %1911 = vmatprep.subr.mxu0 0.0
        %1912 = vmatpush2.xpose.msra.mxu0 0.0
        %1913 = vmatprep.subr.mxu0 0.0
        %1914 = vmatpush2.xpose.msra.mxu0 0.0
        %1915 = vmatprep.subr.mxu0 0.0
        %1916 = vmatpush2.xpose.msra.mxu0 0.0
        %1917 = vmatprep.subr.mxu0 0.0
        %1918 = vmatpush2.xpose.msra.mxu0 0.0
        %1919 = vmatprep.mubr.f32.mxu0 0.0
        %v1920 = vand.u32 %v1419, 4294901760
        %1921 = vmatmul.mubr.f32.gmra.mxu0 %v1920
        %v1922 = vpop.f32.mrf.mxu0
        %v1923 = vadd.f32 %v1844, %v1922
        %v1924 = vpop.f32.mrf.mxu0
        %1925 = vmatprep.mubr.f32.mxu0 0.0
        %v1926 = vand.u32 %v1422, 4294901760
        %1927 = vmatmul.mubr.f32.gmra.mxu0 %v1926
        %v1928 = vpop.f32.mrf.mxu0
        %v1929 = vadd.f32 %v1850, %v1928
        %v1930 = vpop.f32.mrf.mxu0
        %1931 = vdwg.mxu0
        %1932 = vxpose.xlu0.b32.start [1/16] %v1923, 128
        %1933 = vxpose.xlu0.b32.cont [2/16] %v1929, 128
        %1934 = vxpose.xlu0.b32.cont [3/16] 0.0, 128
        %1935 = vxpose.xlu0.b32.cont [4/16] 0.0, 128
        %1936 = vxpose.xlu0.b32.cont [5/16] 0.0, 128
        %1937 = vxpose.xlu0.b32.cont [6/16] 0.0, 128
        %1938 = vxpose.xlu0.b32.cont [7/16] 0.0, 128
        %1939 = vxpose.xlu0.b32.cont [8/16] 0.0, 128
        %1940 = vxpose.xlu0.b32.cont [9/16] 0.0, 128
        %1941 = vxpose.xlu0.b32.cont [10/16] 0.0, 128
        %1942 = vxpose.xlu0.b32.cont [11/16] 0.0, 128
        %1943 = vxpose.xlu0.b32.cont [12/16] 0.0, 128
        %1944 = vxpose.xlu0.b32.cont [13/16] 0.0, 128
        %1945 = vxpose.xlu0.b32.cont [14/16] 0.0, 128
        %1946 = vxpose.xlu0.b32.cont [15/16] 0.0, 128
        %1947 = vxpose.xlu0.b32.end [16/16] 0.0, 128
        %v1948 = vpop.trf.xlu0
        %v1949 = vpop.trf.xlu0
        %v1950 = vpop.trf.xlu0
        %v1951 = vpop.trf.xlu0
        %v1952 = vpop.trf.xlu0
        %v1953 = vpop.trf.xlu0
        %v1954 = vpop.trf.xlu0
        %v1955 = vpop.trf.xlu0
        %v1956 = vpop.trf.xlu0
        %v1957 = vpop.trf.xlu0
        %v1958 = vpop.trf.xlu0
        %v1959 = vpop.trf.xlu0
        %v1960 = vpop.trf.xlu0
        %v1961 = vpop.trf.xlu0
        %v1962 = vpop.trf.xlu0
        %v1963 = vpop.trf.xlu0
        %v1964 = vsub.f32 %v1923, %v1948
        %v1965 = vsub.f32 %v1929, %v1949
        %v1966 = vmul.f32 %v1964, 3.0
        %v1967 = vmul.f32 %v1965, 3.0
        %v1968 = vtanh.pop %v1966
        %v1969 = vtanh.pop %v1967
        %v1970 = vmax.f32 %v1968, 0.0
        %v1971 = vmax.f32 %v1969, 0.0
        %v1972 = vlaneseq
        %v1973 = vand.u32 %v1972, 127
        %v1974 = vcvt.s32.f32 %v1973
        %vm1975 = vcmask 130048
        %v1976 = vsel %vm1975, %v1970, -inf
        %1977 = vmax.xlane.f32.xlu0 %v1976
        %v1978 = vpop.xlane.xlu0 %1977
        %v1979 = vsel %vm1975, %v1971, -inf
        %1980 = vmax.xlane.f32.xlu0 %v1979
        %v1981 = vpop.xlane.xlu0 %1980
        %vm1982 = vcmp.eq.f32.partialorder %v1970, %v1978
        %vm1983 = vcmp.eq.f32.partialorder %v1971, %v1981
        %v1984 = vsel %vm1982, %v1974, 16.0
        %v1985 = vsel %vm1983, %v1974, 16.0
        %v1986 = vsel %vm1975, %v1984, inf
        %1987 = vmin.xlane.f32.xlu0 %v1986
        %v1988 = vpop.xlane.xlu0 %1987
        %v1989 = vsel %vm1975, %v1985, inf
        %1990 = vmin.xlane.f32.xlu0 %v1989
        %v1991 = vpop.xlane.xlu0 %1990
        %vm1992 = vcmp.eq.f32.partialorder %v1974, %v1988
        %vm1993 = vcmp.eq.f32.partialorder %v1974, %v1991
        %v1994 = vsel %vm1992, 1.0, 0.0
        %v1995 = vsel %vm1993, 1.0, 0.0
        %v1996 = vsel %vm1992, -inf, %v1970
        %v1997 = vsel %vm1993, -inf, %v1971
        %v1998 = vsel %vm1975, %v1996, -inf
        %1999 = vmax.xlane.f32.xlu0 %v1998
        %v2000 = vpop.xlane.xlu0 %1999
        %v2001 = vsel %vm1975, %v1997, -inf
        %2002 = vmax.xlane.f32.xlu0 %v2001
        %v2003 = vpop.xlane.xlu0 %2002
        %vm2004 = vcmp.eq.f32.partialorder %v1996, %v2000
        %vm2005 = vcmp.eq.f32.partialorder %v1997, %v2003
        %v2006 = vsel %vm2004, %v1974, 16.0
        %v2007 = vsel %vm2005, %v1974, 16.0
        %v2008 = vsel %vm1975, %v2006, inf
        %2009 = vmin.xlane.f32.xlu0 %v2008
        %v2010 = vpop.xlane.xlu0 %2009
        %v2011 = vsel %vm1975, %v2007, inf
        %2012 = vmin.xlane.f32.xlu0 %v2011
        %v2013 = vpop.xlane.xlu0 %2012
        %vm2014 = vcmp.eq.f32.partialorder %v1974, %v2010
        %vm2015 = vcmp.eq.f32.partialorder %v1974, %v2013
        %v2016 = vsel %vm2014, 1.0, %v1994
        %v2017 = vsel %vm2015, 1.0, %v1995
        %v2018 = vsel %vm2014, -inf, %v1996
        %v2019 = vsel %vm2015, -inf, %v1997
        %v2020 = vsel %vm1975, %v2018, -inf
        %2021 = vmax.xlane.f32.xlu0 %v2020
        %v2022 = vpop.xlane.xlu0 %2021
        %v2023 = vsel %vm1975, %v2019, -inf
        %2024 = vmax.xlane.f32.xlu0 %v2023
        %v2025 = vpop.xlane.xlu0 %2024
        %vm2026 = vcmp.eq.f32.partialorder %v2018, %v2022
        %vm2027 = vcmp.eq.f32.partialorder %v2019, %v2025
        %v2028 = vsel %vm2026, %v1974, 16.0
        %v2029 = vsel %vm2027, %v1974, 16.0
        %v2030 = vsel %vm1975, %v2028, inf
        %2031 = vmin.xlane.f32.xlu0 %v2030
        %v2032 = vpop.xlane.xlu0 %2031
        %v2033 = vsel %vm1975, %v2029, inf
        %2034 = vmin.xlane.f32.xlu0 %v2033
        %v2035 = vpop.xlane.xlu0 %2034
        %vm2036 = vcmp.eq.f32.partialorder %v1974, %v2032
        %vm2037 = vcmp.eq.f32.partialorder %v1974, %v2035
        %v2038 = vsel %vm2036, 1.0, %v2016
        %v2039 = vsel %vm2037, 1.0, %v2017
        %v2040 = vsel %vm2036, -inf, %v2018
        %v2041 = vsel %vm2037, -inf, %v2019
        %v2042 = vsel %vm1975, %v2040, -inf
        %2043 = vmax.xlane.f32.xlu0 %v2042
        %v2044 = vpop.xlane.xlu0 %2043
        %v2045 = vsel %vm1975, %v2041, -inf
        %2046 = vmax.xlane.f32.xlu0 %v2045
        %v2047 = vpop.xlane.xlu0 %2046
        %vm2048 = vcmp.eq.f32.partialorder %v2040, %v2044
        %vm2049 = vcmp.eq.f32.partialorder %v2041, %v2047
        %v2050 = vsel %vm2048, %v1974, 16.0
        %v2051 = vsel %vm2049, %v1974, 16.0
        %v2052 = vsel %vm1975, %v2050, inf
        %2053 = vmin.xlane.f32.xlu0 %v2052
        %v2054 = vpop.xlane.xlu0 %2053
        %v2055 = vsel %vm1975, %v2051, inf
        %2056 = vmin.xlane.f32.xlu0 %v2055
        %v2057 = vpop.xlane.xlu0 %2056
        %vm2058 = vcmp.eq.f32.partialorder %v1974, %v2054
        %vm2059 = vcmp.eq.f32.partialorder %v1974, %v2057
        %v2060 = vsel %vm2058, 1.0, %v2038
        %v2061 = vsel %vm2059, 1.0, %v2039
        %v2062 = vmul.f32 %v1970, %v2060
        %v2063 = vmul.f32 %v1971, %v2061
        %2064 = vst.msk [vmem:[%s281] sm:$0xff] %vm1975, %v2062
        %2065 = vst.msk [vmem:[%s281 + $0x8] sm:$0xff] %vm1975, %v2063
        %s2066 = sand.u32 %s174, 1
        %s2067 = scalar_lea.sflag [#allocation5], %s2066
        %s2068 = sand.u32 %s174, 1
        %s2069 = smul.addr %s2068, 16
        %s2070 = scalar_lea.vmem [#allocation4], %s2069
        // Predicated region
        $region49: #{graph_constructor_forward.1} parent=43 // pred_check
          %p2071 = pneg %p184
        $region50: #{graph_constructor_forward.1} parent=43 // pred_check_branch
          %2073 = sbr.rel (%p2071) target = $region52
        $region51: #{graph_constructor_forward.1} parent=43 // pred_region
          %s2075 = ssub.s32 256, 256
          %2076 = vsyncadd %s2067, %s2075
          %s2077 = smul.addr %s20, 2
          %s2078 = smul.addr %s2077, 128
          %s2079 = scalar_lea.hbm %s6, %s2078
          %s2080 = sshll.u32 %s2070, 4
          %s2081 = int_to_ptr.vmem [resolvable:$true] %s2080
          %2086 = dma.vmem_to_hbm [thread:$0]  %s2081, 256, %s2079, %s2067, 128, 128, 8
        $region52: #{graph_constructor_forward.1} parent=43 // pred_fallthru
          _
      $region44: #{graph_constructor_forward.1} parent=5 // pred_fallthru
        _
      %p2087 = scmp.le.s32.totalorder 2, %s15
      // Predicated region
      $region53: #{graph_constructor_forward.1} parent=5 // pred_check
        %p2088 = pneg %p2087
      $region54: #{graph_constructor_forward.1} parent=5 // pred_check_branch
        %2090 = sbr.rel (%p2088) target = $region56
      $region55: #{graph_constructor_forward.1} parent=5 // pred_region
        %s2091 = ssub.s32 %s15, 2
        // Predicated region
        $region57: #{graph_constructor_forward.1} parent=55 // pred_check
          %p2092 = pneg %p190
        $region58: #{graph_constructor_forward.1} parent=55 // pred_check_branch
          %2094 = sbr.rel (%p2092) target = $region60
        $region59: #{graph_constructor_forward.1} parent=55 // pred_region
          %s2095 = sand.u32 %s175, 1
          %s2096 = scalar_lea.sflag [#allocation5], %s2095
          %s2097 = sand.u32 %s175, 1
          %s2098 = smul.addr %s2097, 16
          %s2099 = scalar_lea.vmem [#allocation4], %s2098
          %2100 = dma.done %s2096, 256
        $region60: #{graph_constructor_forward.1} parent=55 // pred_fallthru
          _
      $region56: #{graph_constructor_forward.1} parent=5 // pred_fallthru
        _
    $region6: #{graph_constructor_forward.1} parent=1 // loop_footer
      %s19 = sadd.s32 1, %s15
    $region7: #{graph_constructor_forward.1} parent=1 // loop_footer_branch
      %14 = sbr.rel target = $region3
    $region8: #{graph_constructor_forward.1} parent=1 // loop_exit
      _
    %2101 = vsyncpa [#allocation5], 1
    %s2102 = scalar_lea.sflag [#allocation5], 1
    %2103 = vsyncpa %s2102, 1

</llo_original>
